<compile_context>
chip_gen: v6e
topology: v6e:2x2x1
jax: 0.10.0
libtpu: 0.0.40
codegen_flags: <defaults>
</compile_context>

<pallas_src>
import math

import jax
import jax.numpy as jnp
from jax.experimental import pallas as pl
from jax.experimental.pallas import tpu as pltpu

NEG_SLOPE = 0.01   # F.leaky_relu default negative_slope
LANE = 128


def _leaky_relu(h):
    # Valid for 0 <= NEG_SLOPE <= 1: single VALU max instead of cmp+select.
    return jnp.maximum(h, NEG_SLOPE * h)


def _round_up(n, m):
    return ((n + m - 1) // m) * m


# ----------------------------------------------------------------------------
# Kernel: one batch tile, all four layers fused, weights resident in VMEM.
# ----------------------------------------------------------------------------
def mlp_kernel(x_ref, v0_ref,
               w1a_ref, w1b_ref, b1_ref,
               w2_ref, b2_ref,
               w3_ref, b3_ref,
               w4_ref, b4_ref,
               o_ref):
    wdt = w1a_ref.dtype   # matmul operand dtype (bf16 by default)

    # Layer 1: K=256 matmul (MXU, bf16 operands, f32 acc) + rank-1 v0 term
    # (f32 VPU broadcast-FMA) + bias + leaky_relu in f32, then one cast.
    h = jnp.dot(x_ref[...], w1a_ref[...], preferred_element_type=jnp.float32)
    h = _leaky_relu(h + v0_ref[...] * w1b_ref[...] + b1_ref[...]).astype(wdt)

    # Layer 2: [TB,512] @ [512,512]
    h = jnp.dot(h, w2_ref[...], preferred_element_type=jnp.float32)
    h = _leaky_relu(h + b2_ref[...]).astype(wdt)

    # Layer 3: [TB,512] @ [512,256]
    h = jnp.dot(h, w3_ref[...], preferred_element_type=jnp.float32)
    h = _leaky_relu(h + b3_ref[...]).astype(wdt)

    # Layer 4 (no activation): [TB,256] @ [256,OUT_PAD], lane-dense output.
    h = jnp.dot(h, w4_ref[...], preferred_element_type=jnp.float32)
    o_ref[...] = (h + b4_ref[...]).astype(o_ref.dtype)


# ----------------------------------------------------------------------------
# Parameter packing: logical (PyTorch-equivalent) params -> kernel layout.
# ----------------------------------------------------------------------------
def pack_params(params, *, weight_dtype=jnp.bfloat16):
    """w1 is split into a K=256 MXU part + the rank-1 v0 row; w4/b4 are padded
    to a lane-dense 128-wide output. Biases / rank-1 row stay f32 (VPU path)."""
    out_dim = params["w4"].shape[1]
    out_pad = _round_up(out_dim, LANE)
    packed = dict(
        w1a=params["w1"][:-1].astype(weight_dtype),            # [256, 512]
        w1b=params["w1"][-1:].astype(jnp.float32),             # [1, 512]
        b1=params["b1"].reshape(1, -1).astype(jnp.float32),
        w2=params["w2"].astype(weight_dtype),
        b2=params["b2"].reshape(1, -1).astype(jnp.float32),
        w3=params["w3"].astype(weight_dtype),
        b3=params["b3"].reshape(1, -1).astype(jnp.float32),
        w4=jnp.pad(params["w4"],
                   ((0, 0), (0, out_pad - out_dim))).astype(weight_dtype),
        b4=jnp.pad(params["b4"].reshape(1, -1),
                   ((0, 0), (0, out_pad - out_dim))).astype(jnp.float32),
    )
    return packed, out_dim


# ----------------------------------------------------------------------------
# Wrapper: batch-tiled pallas_call.
# ----------------------------------------------------------------------------
def mlp_forward(x, v0, packed, out_dim, *, block_batch=1024,
                out_dtype=jnp.float32):
    """x: [B, 256], v0: [B, 1]  ->  [B, out_dim] in out_dtype."""
    B, k0 = x.shape
    assert k0 == packed["w1a"].shape[0], (k0, packed["w1a"].shape)
    assert v0.shape == (B, 1), v0.shape
    assert block_batch >= 1
    out_pad = packed["w4"].shape[1]
    wdt = packed["w1a"].dtype

    # Stream x in the MXU operand dtype (halves the dominant per-row HBM
    # traffic for bf16); keep the rank-1 v0 term in f32.
    if x.dtype != wdt:
        x = x.astype(wdt)
    if v0.dtype != jnp.float32:
        v0 = v0.astype(jnp.float32)

    # Batch tile: multiple of the sublane packing for the activation dtype.
    align = 16 if jnp.dtype(wdt).itemsize == 2 else 8
    tb = min(_round_up(block_batch, align), _round_up(B, align))
    nsteps = pl.cdiv(B, tb)
    if nsteps > 1 and nsteps % 2 == 1:
        # Prefer an even number of grid steps: balanced "parallel" split over
        # v7x's two TensorCores (harmless on single-TC v5e/v6e).
        tb = _round_up(pl.cdiv(B, nsteps + 1), align)
        nsteps = pl.cdiv(B, tb)
    grid = (nsteps,)

    def resident(a):
        # Whole-array block with a constant index -> fetched once, stays in VMEM.
        return pl.BlockSpec(a.shape, lambda i: (0,) * a.ndim)

    weight_args = (packed["w1a"], packed["w1b"], packed["b1"],
                   packed["w2"], packed["b2"],
                   packed["w3"], packed["b3"],
                   packed["w4"], packed["b4"])

    weight_bytes = sum(int(a.size) * a.dtype.itemsize for a in weight_args)
    out_itemsize = jnp.dtype(out_dtype).itemsize
    flops = 2 * B * (k0 * 512 + 512 * 512 + 512 * 256 + 256 * out_pad) + 8 * B * 512
    bytes_accessed = (weight_bytes
                      + B * (k0 * x.dtype.itemsize + 4)
                      + B * out_pad * out_itemsize)

    # VMEM budget: double-buffered streamed blocks + resident weights +
    # headroom for the f32 intermediates; clamp to [32 MiB, 64 MiB].
    est = (2 * tb * (k0 * x.dtype.itemsize + 4)
           + 2 * tb * out_pad * out_itemsize
           + 2 * weight_bytes
           + 6 * tb * 512 * 4)
    vmem_limit = int(min(64 * 1024 * 1024,
                         max(32 * 1024 * 1024, int(1.25 * est))))

    # TODO(synk): for latency-critical tiny-B calls, hide the one-time weight
    # DMA behind preceding JAX work via a cross-pallas_call prefetch (P10).
    out = pl.pallas_call(
        mlp_kernel,
        out_shape=jax.ShapeDtypeStruct((B, out_pad), out_dtype),
        grid=grid,
        in_specs=[
            pl.BlockSpec((tb, k0), lambda i: (i, 0)),   # x : streamed over batch
            pl.BlockSpec((tb, 1), lambda i: (i, 0)),    # v0: streamed over batch
        ] + [resident(a) for a in weight_args],
        out_specs=pl.BlockSpec((tb, out_pad), lambda i: (i, 0)),
        compiler_params=pltpu.CompilerParams(
            dimension_semantics=("parallel",),          # shard batch over v7x TCs
            vmem_limit_bytes=vmem_limit,
        ),
        cost_estimate=pl.CostEstimate(
            flops=flops, transcendentals=0, bytes_accessed=bytes_accessed),
    )(x, v0, *weight_args)

    return out[:, :out_dim]


# ----------------------------------------------------------------------------
# Init (matches PyTorch weights_init: kaiming_uniform_, leaky_relu gain,
# bias = 0.01) and a pure-JAX reference.
# ----------------------------------------------------------------------------
def init_params(key, input_dim=257, output_dim=2):
    dims = [(input_dim, 512), (512, 512), (512, 256), (256, output_dim)]
    params = {}
    keys = jax.random.split(key, len(dims))
    gain = math.sqrt(2.0)  # calculate_gain('leaky_relu', a=0)
    for i, ((fan_in, fan_out), k) in enumerate(zip(dims, keys), start=1):
        bound = gain * math.sqrt(3.0 / fan_in)
        params[f"w{i}"] = jax.random.uniform(
            k, (fan_in, fan_out), jnp.float32, minval=-bound, maxval=bound)
        params[f"b{i}"] = jnp.full((fan_out,), 0.01, jnp.float32)
    return params


def mlp_reference(x, v0, params):
    hi = jax.lax.Precision.HIGHEST
    h = jnp.concatenate([x, v0], axis=1)
    h = _leaky_relu(jnp.dot(h, params["w1"], precision=hi) + params["b1"])
    h = _leaky_relu(jnp.dot(h, params["w2"], precision=hi) + params["b2"])
    h = _leaky_relu(jnp.dot(h, params["w3"], precision=hi) + params["b3"])
    return jnp.dot(h, params["w4"], precision=hi) + params["b4"]


if __name__ == "__main__":
    key = jax.random.PRNGKey(0)
    kp, kx, kv = jax.random.split(key, 3)
    params = init_params(kp, input_dim=257, output_dim=2)

    B = 8
    x = jax.random.normal(kx, (B, 256), jnp.float32)
    v0 = jax.random.normal(kv, (B, 1), jnp.float32)
    ref = mlp_reference(x, v0, params)

    # --- f32 weights: tight-tolerance correctness check ---
    packed_f32, out_dim = pack_params(params, weight_dtype=jnp.float32)
    out_f32 = jax.block_until_ready(mlp_forward(x, v0, packed_f32, out_dim))
    assert out_f32.shape == (B, 2), out_f32.shape
    assert jnp.allclose(out_f32, ref, atol=1e-3, rtol=1e-3), \
        f"f32 max err {float(jnp.max(jnp.abs(out_f32 - ref)))}"

    # --- default path: bf16 weights + bf16 streamed x, f32 accumulation ---
    packed_bf16, _ = pack_params(params)   # bf16 default
    out_bf16 = jax.block_until_ready(mlp_forward(x, v0, packed_bf16, out_dim))
    scale = max(1.0, float(jnp.max(jnp.abs(ref))))
    err = float(jnp.max(jnp.abs(out_bf16 - ref)))
    assert err <= 0.05 * scale, f"bf16 max err {err} (scale {scale})"

    # --- multi-step grid: partial last tile + odd->even grid adjustment ---
    kx2, kv2 = jax.random.split(jax.random.PRNGKey(1))
    B2 = 200
    x2 = jax.random.normal(kx2, (B2, 256), jnp.float32)
    v02 = jax.random.normal(kv2, (B2, 1), jnp.float32)
    ref2 = mlp_reference(x2, v02, params)
    scale2 = max(1.0, float(jnp.max(jnp.abs(ref2))))

    out2 = jax.block_until_ready(
        mlp_forward(x2, v02, packed_bf16, out_dim, block_batch=64))   # 4 steps
    assert out2.shape == (B2, 2), out2.shape
    err2 = float(jnp.max(jnp.abs(out2 - ref2)))
    assert err2 <= 0.05 * scale2, f"grid max err {err2} (scale {scale2})"

    out3 = jax.block_until_ready(
        mlp_forward(x2, v02, packed_bf16, out_dim, block_batch=80))   # odd->even
    err3 = float(jnp.max(jnp.abs(out3 - ref2)))
    assert err3 <= 0.05 * scale2, f"odd-grid max err {err3} (scale {scale2})"

    print("KERNEL_OK")
</pallas_src>

<mosaic_0001>
module attributes {stable_mosaic.version = 11 : i64} {
  func.func @mlp_kernel(%arg0: i32, %arg1: memref<8x256xf32, #tpu.memory_space<vmem>>, %arg2: memref<8x1xf32, #tpu.memory_space<vmem>>, %arg3: memref<256x512xf32, #tpu.memory_space<vmem>>, %arg4: memref<1x512xf32, #tpu.memory_space<vmem>>, %arg5: memref<1x512xf32, #tpu.memory_space<vmem>>, %arg6: memref<512x512xf32, #tpu.memory_space<vmem>>, %arg7: memref<1x512xf32, #tpu.memory_space<vmem>>, %arg8: memref<512x256xf32, #tpu.memory_space<vmem>>, %arg9: memref<1x256xf32, #tpu.memory_space<vmem>>, %arg10: memref<256x128xf32, #tpu.memory_space<vmem>>, %arg11: memref<1x128xf32, #tpu.memory_space<vmem>>, %arg12: memref<8x128xf32, #tpu.memory_space<vmem>>) attributes {dimension_semantics = [#tpu.dimension_semantics<parallel>], iteration_bounds = array<i64: 1>, scalar_prefetch = 0 : i64, scratch_operands = 0 : i64, tpu.core_type = #tpu.core_type<tc>, window_params = [{transform_indices = @transform_0, window_bounds = array<i64: 8, 256>}, {transform_indices = @transform_1, window_bounds = array<i64: 8, 1>}, {pipeline_mode = #tpu.pipeline_mode<synchronous>, transform_indices = @transform_2, window_bounds = array<i64: 256, 512>}, {pipeline_mode = #tpu.pipeline_mode<synchronous>, transform_indices = @transform_3, window_bounds = array<i64: 1, 512>}, {pipeline_mode = #tpu.pipeline_mode<synchronous>, transform_indices = @transform_4, window_bounds = array<i64: 1, 512>}, {pipeline_mode = #tpu.pipeline_mode<synchronous>, transform_indices = @transform_5, window_bounds = array<i64: 512, 512>}, {pipeline_mode = #tpu.pipeline_mode<synchronous>, transform_indices = @transform_6, window_bounds = array<i64: 1, 512>}, {pipeline_mode = #tpu.pipeline_mode<synchronous>, transform_indices = @transform_7, window_bounds = array<i64: 512, 256>}, {pipeline_mode = #tpu.pipeline_mode<synchronous>, transform_indices = @transform_8, window_bounds = array<i64: 1, 256>}, {pipeline_mode = #tpu.pipeline_mode<synchronous>, transform_indices = @transform_9, window_bounds = array<i64: 256, 128>}, {pipeline_mode = #tpu.pipeline_mode<synchronous>, transform_indices = @transform_10, window_bounds = array<i64: 1, 128>}, {transform_indices = @transform_11, window_bounds = array<i64: 8, 128>}]} {
    %c0 = arith.constant 0 : index
    %c0_0 = arith.constant 0 : index
    %0 = vector.load %arg1[%c0, %c0_0] : memref<8x256xf32, #tpu.memory_space<vmem>>, vector<8x256xf32>
    %c0_1 = arith.constant 0 : index
    %c0_2 = arith.constant 0 : index
    %1 = vector.load %arg3[%c0_1, %c0_2] : memref<256x512xf32, #tpu.memory_space<vmem>>, vector<256x512xf32>
    %cst = arith.constant dense<0.000000e+00> : vector<8x512xf32>
    %2 = tpu.matmul %0, %1, %cst {dimension_numbers = #tpu.dot_dimension_numbers<[1], [0], [0], [1], [0, 0, 1, 1], [], []>} : vector<8x256xf32>, vector<256x512xf32>, vector<8x512xf32> -> vector<8x512xf32>
    %c0_3 = arith.constant 0 : index
    %c0_4 = arith.constant 0 : index
    %3 = vector.load %arg2[%c0_3, %c0_4] : memref<8x1xf32, #tpu.memory_space<vmem>>, vector<8x1xf32>
    %c0_5 = arith.constant 0 : index
    %c0_6 = arith.constant 0 : index
    %4 = vector.load %arg4[%c0_5, %c0_6] : memref<1x512xf32, #tpu.memory_space<vmem>>, vector<1x512xf32>
    %5 = vector.broadcast %3 : vector<8x1xf32> to vector<8x512xf32>
    %6 = vector.broadcast %4 : vector<1x512xf32> to vector<8x512xf32>
    %7 = arith.mulf %5, %6 : vector<8x512xf32>
    %8 = arith.addf %2, %7 : vector<8x512xf32>
    %c0_7 = arith.constant 0 : index
    %c0_8 = arith.constant 0 : index
    %9 = vector.load %arg5[%c0_7, %c0_8] : memref<1x512xf32, #tpu.memory_space<vmem>>, vector<1x512xf32>
    %10 = vector.broadcast %9 : vector<1x512xf32> to vector<8x512xf32>
    %11 = arith.addf %8, %10 : vector<8x512xf32>
    %cst_9 = arith.constant 0.00999999977 : f32
    %12 = vector.broadcast %cst_9 : f32 to vector<8x512xf32>
    %13 = arith.mulf %12, %11 : vector<8x512xf32>
    %14 = arith.maximumf %11, %13 : vector<8x512xf32>
    %c0_10 = arith.constant 0 : index
    %c0_11 = arith.constant 0 : index
    %15 = vector.load %arg6[%c0_10, %c0_11] : memref<512x512xf32, #tpu.memory_space<vmem>>, vector<512x512xf32>
    %cst_12 = arith.constant dense<0.000000e+00> : vector<8x512xf32>
    %16 = tpu.matmul %14, %15, %cst_12 {dimension_numbers = #tpu.dot_dimension_numbers<[1], [0], [0], [1], [0, 0, 1, 1], [], []>} : vector<8x512xf32>, vector<512x512xf32>, vector<8x512xf32> -> vector<8x512xf32>
    %c0_13 = arith.constant 0 : index
    %c0_14 = arith.constant 0 : index
    %17 = vector.load %arg7[%c0_13, %c0_14] : memref<1x512xf32, #tpu.memory_space<vmem>>, vector<1x512xf32>
    %18 = vector.broadcast %17 : vector<1x512xf32> to vector<8x512xf32>
    %19 = arith.addf %16, %18 : vector<8x512xf32>
    %cst_15 = arith.constant 0.00999999977 : f32
    %20 = vector.broadcast %cst_15 : f32 to vector<8x512xf32>
    %21 = arith.mulf %20, %19 : vector<8x512xf32>
    %22 = arith.maximumf %19, %21 : vector<8x512xf32>
    %c0_16 = arith.constant 0 : index
    %c0_17 = arith.constant 0 : index
    %23 = vector.load %arg8[%c0_16, %c0_17] : memref<512x256xf32, #tpu.memory_space<vmem>>, vector<512x256xf32>
    %cst_18 = arith.constant dense<0.000000e+00> : vector<8x256xf32>
    %24 = tpu.matmul %22, %23, %cst_18 {dimension_numbers = #tpu.dot_dimension_numbers<[1], [0], [0], [1], [0, 0, 1, 1], [], []>} : vector<8x512xf32>, vector<512x256xf32>, vector<8x256xf32> -> vector<8x256xf32>
    %c0_19 = arith.constant 0 : index
    %c0_20 = arith.constant 0 : index
    %25 = vector.load %arg9[%c0_19, %c0_20] : memref<1x256xf32, #tpu.memory_space<vmem>>, vector<1x256xf32>
    %26 = vector.broadcast %25 : vector<1x256xf32> to vector<8x256xf32>
    %27 = arith.addf %24, %26 : vector<8x256xf32>
    %cst_21 = arith.constant 0.00999999977 : f32
    %28 = vector.broadcast %cst_21 : f32 to vector<8x256xf32>
    %29 = arith.mulf %28, %27 : vector<8x256xf32>
    %30 = arith.maximumf %27, %29 : vector<8x256xf32>
    %c0_22 = arith.constant 0 : index
    %c0_23 = arith.constant 0 : index
    %31 = vector.load %arg10[%c0_22, %c0_23] : memref<256x128xf32, #tpu.memory_space<vmem>>, vector<256x128xf32>
    %cst_24 = arith.constant dense<0.000000e+00> : vector<8x128xf32>
    %32 = tpu.matmul %30, %31, %cst_24 {dimension_numbers = #tpu.dot_dimension_numbers<[1], [0], [0], [1], [0, 0, 1, 1], [], []>} : vector<8x256xf32>, vector<256x128xf32>, vector<8x128xf32> -> vector<8x128xf32>
    %c0_25 = arith.constant 0 : index
    %c0_26 = arith.constant 0 : index
    %33 = vector.load %arg11[%c0_25, %c0_26] : memref<1x128xf32, #tpu.memory_space<vmem>>, vector<1x128xf32>
    %34 = vector.broadcast %33 : vector<1x128xf32> to vector<8x128xf32>
    %35 = arith.addf %32, %34 : vector<8x128xf32>
    %c0_27 = arith.constant 0 : index
    %c0_28 = arith.constant 0 : index
    %36 = vector.load %arg12[%c0_27, %c0_28] : memref<8x128xf32, #tpu.memory_space<vmem>>, vector<8x128xf32>
    tpu.vector_store %arg12[%c0_27, %c0_28], %35 {strides = array<i32>} : memref<8x128xf32, #tpu.memory_space<vmem>>, vector<8x128xf32>,
    return
  }
  func.func @transform_0(%arg0: i32) -> (i32, i32) {
    %c0_i32 = arith.constant 0 : i32
    %c0_i32_0 = arith.constant 0 : i32
    return %arg0, %c0_i32 : i32, i32
  }
  func.func @transform_1(%arg0: i32) -> (i32, i32) {
    %c0_i32 = arith.constant 0 : i32
    %c0_i32_0 = arith.constant 0 : i32
    return %arg0, %c0_i32 : i32, i32
  }
  func.func @transform_2(%arg0: i32) -> (i32, i32) {
    %c0_i32 = arith.constant 0 : i32
    %c0_i32_0 = arith.constant 0 : i32
    %c0_i32_1 = arith.constant 0 : i32
    return %c0_i32, %c0_i32_0 : i32, i32
  }
  func.func @transform_3(%arg0: i32) -> (i32, i32) {
    %c0_i32 = arith.constant 0 : i32
    %c0_i32_0 = arith.constant 0 : i32
    %c0_i32_1 = arith.constant 0 : i32
    return %c0_i32, %c0_i32_0 : i32, i32
  }
  func.func @transform_4(%arg0: i32) -> (i32, i32) {
    %c0_i32 = arith.constant 0 : i32
    %c0_i32_0 = arith.constant 0 : i32
    %c0_i32_1 = arith.constant 0 : i32
    return %c0_i32, %c0_i32_0 : i32, i32
  }
  func.func @transform_5(%arg0: i32) -> (i32, i32) {
    %c0_i32 = arith.constant 0 : i32
    %c0_i32_0 = arith.constant 0 : i32
    %c0_i32_1 = arith.constant 0 : i32
    return %c0_i32, %c0_i32_0 : i32, i32
  }
  func.func @transform_6(%arg0: i32) -> (i32, i32) {
    %c0_i32 = arith.constant 0 : i32
    %c0_i32_0 = arith.constant 0 : i32
    %c0_i32_1 = arith.constant 0 : i32
    return %c0_i32, %c0_i32_0 : i32, i32
  }
  func.func @transform_7(%arg0: i32) -> (i32, i32) {
    %c0_i32 = arith.constant 0 : i32
    %c0_i32_0 = arith.constant 0 : i32
    %c0_i32_1 = arith.constant 0 : i32
    return %c0_i32, %c0_i32_0 : i32, i32
  }
  func.func @transform_8(%arg0: i32) -> (i32, i32) {
    %c0_i32 = arith.constant 0 : i32
    %c0_i32_0 = arith.constant 0 : i32
    %c0_i32_1 = arith.constant 0 : i32
    return %c0_i32, %c0_i32_0 : i32, i32
  }
  func.func @transform_9(%arg0: i32) -> (i32, i32) {
    %c0_i32 = arith.constant 0 : i32
    %c0_i32_0 = arith.constant 0 : i32
    %c0_i32_1 = arith.constant 0 : i32
    return %c0_i32, %c0_i32_0 : i32, i32
  }
  func.func @transform_10(%arg0: i32) -> (i32, i32) {
    %c0_i32 = arith.constant 0 : i32
    %c0_i32_0 = arith.constant 0 : i32
    %c0_i32_1 = arith.constant 0 : i32
    return %c0_i32, %c0_i32_0 : i32, i32
  }
  func.func @transform_11(%arg0: i32) -> (i32, i32) {
    %c0_i32 = arith.constant 0 : i32
    %c0_i32_0 = arith.constant 0 : i32
    return %arg0, %c0_i32 : i32, i32
  }
}

</mosaic_0001>

<llo_original>
// kernel: tpu_custom_call.1
$region0: #{tpu_custom_call.1}
  #allocation0 [shape = 'u32[]', space=smem, size = 0x4, offset = 0x4, fixed_abs, tag = 'smem constant byte address 0x4 - core index']
  #allocation1 [shape = 'u32[144,128]{1,0:T(1,128)}', space=vmem, size = 0x12000, scoped, tag = 'internal scratch']
  %s0 = inlined_call_operand.hbm [shape: f32[8,256], index: 0, kind: input, shape index: {}]
  %s1 = inlined_call_operand.vmem [shape: f32[8,1], index: 1, kind: input, shape index: {}]
  %s2 = inlined_call_operand.hbm [shape: f32[256,512], index: 2, kind: input, shape index: {}]
  %s3 = inlined_call_operand.vmem [shape: f32[1,512], index: 3, kind: input, shape index: {}]
  %s4 = inlined_call_operand.vmem [shape: f32[1,512], index: 4, kind: input, shape index: {}]
  %s5 = inlined_call_operand.hbm [shape: f32[512,512], index: 5, kind: input, shape index: {}]
  %s6 = inlined_call_operand.vmem [shape: f32[1,512], index: 6, kind: input, shape index: {}]
  %s7 = inlined_call_operand.hbm [shape: f32[512,256], index: 7, kind: input, shape index: {}]
  %s8 = inlined_call_operand.vmem [shape: f32[1,256], index: 8, kind: input, shape index: {}]
  %s9 = inlined_call_operand.hbm [shape: f32[256,128], index: 9, kind: input, shape index: {}]
  %s10 = inlined_call_operand.vmem [shape: f32[1,128], index: 10, kind: input, shape index: {}]
  %s11 = inlined_call_operand.hbm [shape: f32[8,128], index: 11, kind: output, shape index: {}]
  %s12 = sld [smem:[#allocation0]]
  $region74: #{tpu_custom_call.1} parent=0
    _
  %s14 = ssub.s32 1, %s12
  %s15 = scalar_select 0, %s14, %s12
  $region1: #{tpu_custom_call.1} parent=0
    #allocation2 [shape = 'u8[8192]{0}', space=vmem, size = 0x2000, scoped, tag = 'input window, operand 0, single buffered']
    #allocation3 [shape = 's32[1]{0}', space=sflag, size = 0x4, scoped, tag = 'scoped memory for tpu_custom_call.1']
    #allocation4 [shape = 's32[1]{0}', space=sflag, size = 0x4, scoped, tag = 'scoped memory for tpu_custom_call.1']
    #allocation5 [shape = 'u8[524288]{0}', space=vmem, size = 0x80000, scoped, tag = 'input window, operand 2, single buffered']
    #allocation6 [shape = 's32[1]{0}', space=sflag, size = 0x4, scoped, tag = 'scoped memory for tpu_custom_call.1']
    #allocation7 [shape = 'u8[1048576]{0}', space=vmem, size = 0x100000, scoped, tag = 'input window, operand 5, single buffered']
    #allocation8 [shape = 'u8[524288]{0}', space=vmem, size = 0x80000, scoped, tag = 'input window, operand 7, single buffered']
    #allocation9 [shape = 's32[1]{0}', space=sflag, size = 0x4, scoped, tag = 'scoped memory for tpu_custom_call.1']
    #allocation10 [shape = 'u8[131072]{0}', space=vmem, size = 0x20000, scoped, tag = 'input window, operand 9, single buffered']
    #allocation11 [shape = 'u8[4096]{0}', space=vmem, size = 0x1000, scoped, tag = 'output window, operand 0, single buffered']
    %16 = vsyncpa [#allocation3], 0
    %17 = vsyncpa [#allocation6], 0
    %18 = vsyncpa [#allocation9], 0
    %19 = vsyncpa [#allocation4], 0
    // Predicated region
    $region2: #{tpu_custom_call.1} parent=1 // pred_check
      _
    $region3: #{tpu_custom_call.1} parent=1 // pred_check_branch
      %21 = sbr.rel (0) target = $region5
    $region4: #{tpu_custom_call.1} parent=1 // pred_region
      %s23 = ssub.s32 256, 256
      %24 = vsyncadd [#allocation3], %s23
      %s26 = sshll.u32 [#allocation2], 4
      %s27 = int_to_ptr.vmem [resolvable:$true] %s26
      %29 = dma.hbm_to_vmem [thread:$0]  %s0, 256, %s27, [#allocation3]
    $region5: #{tpu_custom_call.1} parent=1 // pred_fallthru
      _
    // Predicated region
    $region6: #{tpu_custom_call.1} parent=1 // pred_check
      _
    $region7: #{tpu_custom_call.1} parent=1 // pred_check_branch
      %31 = sbr.rel (0) target = $region9
    $region8: #{tpu_custom_call.1} parent=1 // pred_region
      _
    $region9: #{tpu_custom_call.1} parent=1 // pred_fallthru
      _
    // Predicated region
    $region10: #{tpu_custom_call.1} parent=1 // pred_check
      _
    $region11: #{tpu_custom_call.1} parent=1 // pred_check_branch
      %33 = sbr.rel (0) target = $region13
    $region12: #{tpu_custom_call.1} parent=1 // pred_region
      %s35 = ssub.s32 16384, 16384
      %36 = vsyncadd [#allocation6], %s35
      %s37 = sshll.u32 [#allocation5], 4
      %s38 = int_to_ptr.vmem [resolvable:$true] %s37
      %43 = dma.hbm_to_vmem [thread:$0]  %s2, 16384, %s38, [#allocation6], 512, 512, 32
    $region13: #{tpu_custom_call.1} parent=1 // pred_fallthru
      _
    // Predicated region
    $region14: #{tpu_custom_call.1} parent=1 // pred_check
      _
    $region15: #{tpu_custom_call.1} parent=1 // pred_check_branch
      %45 = sbr.rel (0) target = $region17
    $region16: #{tpu_custom_call.1} parent=1 // pred_region
      _
    $region17: #{tpu_custom_call.1} parent=1 // pred_fallthru
      _
    // Predicated region
    $region18: #{tpu_custom_call.1} parent=1 // pred_check
      _
    $region19: #{tpu_custom_call.1} parent=1 // pred_check_branch
      %47 = sbr.rel (0) target = $region21
    $region20: #{tpu_custom_call.1} parent=1 // pred_region
      _
    $region21: #{tpu_custom_call.1} parent=1 // pred_fallthru
      _
    // Predicated region
    $region22: #{tpu_custom_call.1} parent=1 // pred_check
      _
    $region23: #{tpu_custom_call.1} parent=1 // pred_check_branch
      %49 = sbr.rel (0) target = $region25
    $region24: #{tpu_custom_call.1} parent=1 // pred_region
      %s51 = ssub.s32 32768, 32768
      %52 = vsyncadd [#allocation6], %s51
      %s53 = sshll.u32 [#allocation7], 4
      %s54 = int_to_ptr.vmem [resolvable:$true] %s53
      %59 = dma.hbm_to_vmem [thread:$0]  %s5, 32768, %s54, [#allocation6], 512, 512, 32
    $region25: #{tpu_custom_call.1} parent=1 // pred_fallthru
      _
    // Predicated region
    $region26: #{tpu_custom_call.1} parent=1 // pred_check
      _
    $region27: #{tpu_custom_call.1} parent=1 // pred_check_branch
      %61 = sbr.rel (0) target = $region29
    $region28: #{tpu_custom_call.1} parent=1 // pred_region
      _
    $region29: #{tpu_custom_call.1} parent=1 // pred_fallthru
      _
    // Predicated region
    $region30: #{tpu_custom_call.1} parent=1 // pred_check
      _
    $region31: #{tpu_custom_call.1} parent=1 // pred_check_branch
      %63 = sbr.rel (0) target = $region33
    $region32: #{tpu_custom_call.1} parent=1 // pred_region
      %s65 = ssub.s32 16384, 16384
      %66 = vsyncadd [#allocation9], %s65
      %s67 = sshll.u32 [#allocation8], 4
      %s68 = int_to_ptr.vmem [resolvable:$true] %s67
      %73 = dma.hbm_to_vmem [thread:$0]  %s7, 16384, %s68, [#allocation9], 256, 256, 16
    $region33: #{tpu_custom_call.1} parent=1 // pred_fallthru
      _
    // Predicated region
    $region34: #{tpu_custom_call.1} parent=1 // pred_check
      _
    $region35: #{tpu_custom_call.1} parent=1 // pred_check_branch
      %75 = sbr.rel (0) target = $region37
    $region36: #{tpu_custom_call.1} parent=1 // pred_region
      _
    $region37: #{tpu_custom_call.1} parent=1 // pred_fallthru
      _
    // Predicated region
    $region38: #{tpu_custom_call.1} parent=1 // pred_check
      _
    $region39: #{tpu_custom_call.1} parent=1 // pred_check_branch
      %77 = sbr.rel (0) target = $region41
    $region40: #{tpu_custom_call.1} parent=1 // pred_region
      %s79 = ssub.s32 4096, 4096
      %80 = vsyncadd [#allocation9], %s79
      %s81 = sshll.u32 [#allocation10], 4
      %s82 = int_to_ptr.vmem [resolvable:$true] %s81
      %87 = dma.hbm_to_vmem [thread:$0]  %s9, 4096, %s82, [#allocation9], 128, 128, 8
    $region41: #{tpu_custom_call.1} parent=1 // pred_fallthru
      _
    // Predicated region
    $region42: #{tpu_custom_call.1} parent=1 // pred_check
      _
    $region43: #{tpu_custom_call.1} parent=1 // pred_check_branch
      %89 = sbr.rel (0) target = $region45
    $region44: #{tpu_custom_call.1} parent=1 // pred_region
      _
    $region45: #{tpu_custom_call.1} parent=1 // pred_fallthru
      _
    // Predicated region
    $region46: #{tpu_custom_call.1} parent=1 // pred_check
      _
    $region47: #{tpu_custom_call.1} parent=1 // pred_check_branch
      %91 = sbr.rel (0) target = $region49
    $region48: #{tpu_custom_call.1} parent=1 // pred_region
      %92 = dma.done [#allocation3], 256
    $region49: #{tpu_custom_call.1} parent=1 // pred_fallthru
      _
    // Predicated region
    $region50: #{tpu_custom_call.1} parent=1 // pred_check
      _
    $region51: #{tpu_custom_call.1} parent=1 // pred_check_branch
      %94 = sbr.rel (0) target = $region53
    $region52: #{tpu_custom_call.1} parent=1 // pred_region
      %95 = dma.done [#allocation6], 16384
    $region53: #{tpu_custom_call.1} parent=1 // pred_fallthru
      _
    // Predicated region
    $region54: #{tpu_custom_call.1} parent=1 // pred_check
      _
    $region55: #{tpu_custom_call.1} parent=1 // pred_check_branch
      %97 = sbr.rel (0) target = $region57
    $region56: #{tpu_custom_call.1} parent=1 // pred_region
      %98 = dma.done [#allocation6], 32768
    $region57: #{tpu_custom_call.1} parent=1 // pred_fallthru
      _
    // Predicated region
    $region58: #{tpu_custom_call.1} parent=1 // pred_check
      _
    $region59: #{tpu_custom_call.1} parent=1 // pred_check_branch
      %100 = sbr.rel (0) target = $region61
    $region60: #{tpu_custom_call.1} parent=1 // pred_region
      %101 = dma.done [#allocation9], 16384
    $region61: #{tpu_custom_call.1} parent=1 // pred_fallthru
      _
    // Predicated region
    $region62: #{tpu_custom_call.1} parent=1 // pred_check
      _
    $region63: #{tpu_custom_call.1} parent=1 // pred_check_branch
      %103 = sbr.rel (0) target = $region65
    $region64: #{tpu_custom_call.1} parent=1 // pred_region
      %104 = dma.done [#allocation9], 4096
    $region65: #{tpu_custom_call.1} parent=1 // pred_fallthru
      _
    %v105 = vld [vmem:[#allocation2] sm:$0xff]
    %v106 = vld [vmem:[#allocation2 + $0x8] sm:$0xff]
    %v107 = vld [vmem:[#allocation5] sm:$0xff]
    %v108 = vld [vmem:[#allocation5 + $0x8] sm:$0xff]
    %v109 = vld [vmem:[#allocation5 + $0x10] sm:$0xff]
    %v110 = vld [vmem:[#allocation5 + $0x18] sm:$0xff]
    %v111 = vld [vmem:[#allocation5 + $0x20] sm:$0xff]
    %v112 = vld [vmem:[#allocation5 + $0x28] sm:$0xff]
    %v113 = vld [vmem:[#allocation5 + $0x30] sm:$0xff]
    %v114 = vld [vmem:[#allocation5 + $0x38] sm:$0xff]
    %v115 = vld [vmem:[#allocation5 + $0x40] sm:$0xff]
    %v116 = vld [vmem:[#allocation5 + $0x48] sm:$0xff]
    %v117 = vld [vmem:[#allocation5 + $0x50] sm:$0xff]
    %v118 = vld [vmem:[#allocation5 + $0x58] sm:$0xff]
    %v119 = vld [vmem:[#allocation5 + $0x60] sm:$0xff]
    %v120 = vld [vmem:[#allocation5 + $0x68] sm:$0xff]
    %v121 = vld [vmem:[#allocation5 + $0x70] sm:$0xff]
    %v122 = vld [vmem:[#allocation5 + $0x78] sm:$0xff]
    %v123 = vld [vmem:[#allocation5 + $0x80] sm:$0xff]
    %v124 = vld [vmem:[#allocation5 + $0x88] sm:$0xff]
    %v125 = vld [vmem:[#allocation5 + $0x90] sm:$0xff]
    %v126 = vld [vmem:[#allocation5 + $0x98] sm:$0xff]
    %v127 = vld [vmem:[#allocation5 + $0xa0] sm:$0xff]
    %v128 = vld [vmem:[#allocation5 + $0xa8] sm:$0xff]
    %v129 = vld [vmem:[#allocation5 + $0xb0] sm:$0xff]
    %v130 = vld [vmem:[#allocation5 + $0xb8] sm:$0xff]
    %v131 = vld [vmem:[#allocation5 + $0xc0] sm:$0xff]
    %v132 = vld [vmem:[#allocation5 + $0xc8] sm:$0xff]
    %v133 = vld [vmem:[#allocation5 + $0xd0] sm:$0xff]
    %v134 = vld [vmem:[#allocation5 + $0xd8] sm:$0xff]
    %v135 = vld [vmem:[#allocation5 + $0xe0] sm:$0xff]
    %v136 = vld [vmem:[#allocation5 + $0xe8] sm:$0xff]
    %v137 = vld [vmem:[#allocation5 + $0xf0] sm:$0xff]
    %v138 = vld [vmem:[#allocation5 + $0xf8] sm:$0xff]
    %v139 = vld [vmem:[#allocation5 + $0x100] sm:$0xff]
    %v140 = vld [vmem:[#allocation5 + $0x108] sm:$0xff]
    %v141 = vld [vmem:[#allocation5 + $0x110] sm:$0xff]
    %v142 = vld [vmem:[#allocation5 + $0x118] sm:$0xff]
    %v143 = vld [vmem:[#allocation5 + $0x120] sm:$0xff]
    %v144 = vld [vmem:[#allocation5 + $0x128] sm:$0xff]
    %v145 = vld [vmem:[#allocation5 + $0x130] sm:$0xff]
    %v146 = vld [vmem:[#allocation5 + $0x138] sm:$0xff]
    %v147 = vld [vmem:[#allocation5 + $0x140] sm:$0xff]
    %v148 = vld [vmem:[#allocation5 + $0x148] sm:$0xff]
    %v149 = vld [vmem:[#allocation5 + $0x150] sm:$0xff]
    %v150 = vld [vmem:[#allocation5 + $0x158] sm:$0xff]
    %v151 = vld [vmem:[#allocation5 + $0x160] sm:$0xff]
    %v152 = vld [vmem:[#allocation5 + $0x168] sm:$0xff]
    %v153 = vld [vmem:[#allocation5 + $0x170] sm:$0xff]
    %v154 = vld [vmem:[#allocation5 + $0x178] sm:$0xff]
    %v155 = vld [vmem:[#allocation5 + $0x180] sm:$0xff]
    %v156 = vld [vmem:[#allocation5 + $0x188] sm:$0xff]
    %v157 = vld [vmem:[#allocation5 + $0x190] sm:$0xff]
    %v158 = vld [vmem:[#allocation5 + $0x198] sm:$0xff]
    %v159 = vld [vmem:[#allocation5 + $0x1a0] sm:$0xff]
    %v160 = vld [vmem:[#allocation5 + $0x1a8] sm:$0xff]
    %v161 = vld [vmem:[#allocation5 + $0x1b0] sm:$0xff]
    %v162 = vld [vmem:[#allocation5 + $0x1b8] sm:$0xff]
    %v163 = vld [vmem:[#allocation5 + $0x1c0] sm:$0xff]
    %v164 = vld [vmem:[#allocation5 + $0x1c8] sm:$0xff]
    %v165 = vld [vmem:[#allocation5 + $0x1d0] sm:$0xff]
    %v166 = vld [vmem:[#allocation5 + $0x1d8] sm:$0xff]
    %v167 = vld [vmem:[#allocation5 + $0x1e0] sm:$0xff]
    %v168 = vld [vmem:[#allocation5 + $0x1e8] sm:$0xff]
    %v169 = vld [vmem:[#allocation5 + $0x1f0] sm:$0xff]
    %v170 = vld [vmem:[#allocation5 + $0x1f8] sm:$0xff]
    %v171 = vld [vmem:[#allocation5 + $0x200] sm:$0xff]
    %v172 = vld [vmem:[#allocation5 + $0x208] sm:$0xff]
    %v173 = vld [vmem:[#allocation5 + $0x210] sm:$0xff]
    %v174 = vld [vmem:[#allocation5 + $0x218] sm:$0xff]
    %v175 = vld [vmem:[#allocation5 + $0x220] sm:$0xff]
    %v176 = vld [vmem:[#allocation5 + $0x228] sm:$0xff]
    %v177 = vld [vmem:[#allocation5 + $0x230] sm:$0xff]
    %v178 = vld [vmem:[#allocation5 + $0x238] sm:$0xff]
    %v179 = vld [vmem:[#allocation5 + $0x240] sm:$0xff]
    %v180 = vld [vmem:[#allocation5 + $0x248] sm:$0xff]
    %v181 = vld [vmem:[#allocation5 + $0x250] sm:$0xff]
    %v182 = vld [vmem:[#allocation5 + $0x258] sm:$0xff]
    %v183 = vld [vmem:[#allocation5 + $0x260] sm:$0xff]
    %v184 = vld [vmem:[#allocation5 + $0x268] sm:$0xff]
    %v185 = vld [vmem:[#allocation5 + $0x270] sm:$0xff]
    %v186 = vld [vmem:[#allocation5 + $0x278] sm:$0xff]
    %v187 = vld [vmem:[#allocation5 + $0x280] sm:$0xff]
    %v188 = vld [vmem:[#allocation5 + $0x288] sm:$0xff]
    %v189 = vld [vmem:[#allocation5 + $0x290] sm:$0xff]
    %v190 = vld [vmem:[#allocation5 + $0x298] sm:$0xff]
    %v191 = vld [vmem:[#allocation5 + $0x2a0] sm:$0xff]
    %v192 = vld [vmem:[#allocation5 + $0x2a8] sm:$0xff]
    %v193 = vld [vmem:[#allocation5 + $0x2b0] sm:$0xff]
    %v194 = vld [vmem:[#allocation5 + $0x2b8] sm:$0xff]
    %v195 = vld [vmem:[#allocation5 + $0x2c0] sm:$0xff]
    %v196 = vld [vmem:[#allocation5 + $0x2c8] sm:$0xff]
    %v197 = vld [vmem:[#allocation5 + $0x2d0] sm:$0xff]
    %v198 = vld [vmem:[#allocation5 + $0x2d8] sm:$0xff]
    %v199 = vld [vmem:[#allocation5 + $0x2e0] sm:$0xff]
    %v200 = vld [vmem:[#allocation5 + $0x2e8] sm:$0xff]
    %v201 = vld [vmem:[#allocation5 + $0x2f0] sm:$0xff]
    %v202 = vld [vmem:[#allocation5 + $0x2f8] sm:$0xff]
    %v203 = vld [vmem:[#allocation5 + $0x300] sm:$0xff]
    %v204 = vld [vmem:[#allocation5 + $0x308] sm:$0xff]
    %v205 = vld [vmem:[#allocation5 + $0x310] sm:$0xff]
    %v206 = vld [vmem:[#allocation5 + $0x318] sm:$0xff]
    %v207 = vld [vmem:[#allocation5 + $0x320] sm:$0xff]
    %v208 = vld [vmem:[#allocation5 + $0x328] sm:$0xff]
    %v209 = vld [vmem:[#allocation5 + $0x330] sm:$0xff]
    %v210 = vld [vmem:[#allocation5 + $0x338] sm:$0xff]
    %v211 = vld [vmem:[#allocation5 + $0x340] sm:$0xff]
    %v212 = vld [vmem:[#allocation5 + $0x348] sm:$0xff]
    %v213 = vld [vmem:[#allocation5 + $0x350] sm:$0xff]
    %v214 = vld [vmem:[#allocation5 + $0x358] sm:$0xff]
    %v215 = vld [vmem:[#allocation5 + $0x360] sm:$0xff]
    %v216 = vld [vmem:[#allocation5 + $0x368] sm:$0xff]
    %v217 = vld [vmem:[#allocation5 + $0x370] sm:$0xff]
    %v218 = vld [vmem:[#allocation5 + $0x378] sm:$0xff]
    %v219 = vld [vmem:[#allocation5 + $0x380] sm:$0xff]
    %v220 = vld [vmem:[#allocation5 + $0x388] sm:$0xff]
    %v221 = vld [vmem:[#allocation5 + $0x390] sm:$0xff]
    %v222 = vld [vmem:[#allocation5 + $0x398] sm:$0xff]
    %v223 = vld [vmem:[#allocation5 + $0x3a0] sm:$0xff]
    %v224 = vld [vmem:[#allocation5 + $0x3a8] sm:$0xff]
    %v225 = vld [vmem:[#allocation5 + $0x3b0] sm:$0xff]
    %v226 = vld [vmem:[#allocation5 + $0x3b8] sm:$0xff]
    %v227 = vld [vmem:[#allocation5 + $0x3c0] sm:$0xff]
    %v228 = vld [vmem:[#allocation5 + $0x3c8] sm:$0xff]
    %v229 = vld [vmem:[#allocation5 + $0x3d0] sm:$0xff]
    %v230 = vld [vmem:[#allocation5 + $0x3d8] sm:$0xff]
    %v231 = vld [vmem:[#allocation5 + $0x3e0] sm:$0xff]
    %v232 = vld [vmem:[#allocation5 + $0x3e8] sm:$0xff]
    %v233 = vld [vmem:[#allocation5 + $0x3f0] sm:$0xff]
    %v234 = vld [vmem:[#allocation5 + $0x3f8] sm:$0xff]
    %v235 = vld [vmem:[%s1] sm:$0xff]
    %v236 = vld [vmem:[%s3] sm:$0xf]
    %238 = vset.pattern.permute.xlu0 0
    %239 = vperm.xlu0 %238, %v235
    %v240 = vpop.permute.xlu0 %239
    %v243 = vlaneseq
    %v244 = vshrl.u32 %v243, 7
    %v245 = vsub.s32 0, %v244
    %v246 = vrot.slane %v236, %v245
    %v247 = vlaneseq
    %v248 = vshrl.u32 %v247, 7
    %v249 = vsub.s32 1, %v248
    %v250 = vrot.slane %v236, %v249
    %v251 = vlaneseq
    %v252 = vshrl.u32 %v251, 7
    %v253 = vsub.s32 2, %v252
    %v254 = vrot.slane %v236, %v253
    %v255 = vlaneseq
    %v256 = vshrl.u32 %v255, 7
    %v257 = vsub.s32 3, %v256
    %v258 = vrot.slane %v236, %v257
    %v263 = vmul.f32 %v240, %v246
    %v264 = vmul.f32 %v240, %v250
    %v265 = vmul.f32 %v240, %v254
    %v266 = vmul.f32 %v240, %v258
    %267 = vmatprep.subr.mxu0 %v168
    %268 = vmatpush1.msra.mxu0 %v167
    %269 = vmatprep.subr.mxu0 %v164
    %270 = vmatpush1.msra.mxu0 %v163
    %271 = vmatprep.subr.mxu0 %v160
    %272 = vmatpush1.msra.mxu0 %v159
    %273 = vmatprep.subr.mxu0 %v156
    %274 = vmatpush1.msra.mxu0 %v155
    %275 = vmatprep.subr.mxu0 %v152
    %276 = vmatpush1.msra.mxu0 %v151
    %277 = vmatprep.subr.mxu0 %v148
    %278 = vmatpush1.msra.mxu0 %v147
    %279 = vmatprep.subr.mxu0 %v144
    %280 = vmatpush1.msra.mxu0 %v143
    %281 = vmatprep.subr.mxu0 %v140
    %282 = vmatpush1.msra.mxu0 %v139
    %283 = vmatprep.subr.mxu0 %v136
    %284 = vmatpush1.msra.mxu0 %v135
    %285 = vmatprep.subr.mxu0 %v132
    %286 = vmatpush1.msra.mxu0 %v131
    %287 = vmatprep.subr.mxu0 %v128
    %288 = vmatpush1.msra.mxu0 %v127
    %289 = vmatprep.subr.mxu0 %v124
    %290 = vmatpush1.msra.mxu0 %v123
    %291 = vmatprep.subr.mxu0 %v120
    %292 = vmatpush1.msra.mxu0 %v119
    %293 = vmatprep.subr.mxu0 %v116
    %294 = vmatpush1.msra.mxu0 %v115
    %295 = vmatprep.subr.mxu0 %v112
    %296 = vmatpush1.msra.mxu0 %v111
    %297 = vmatprep.subr.mxu0 %v108
    %298 = vmatpush1.msra.mxu0 %v107
    %299 = vmatprep.subr.mxu0 %v232
    %300 = vmatpush2.msra.mxu0 %v231
    %301 = vmatprep.subr.mxu0 %v228
    %302 = vmatpush2.msra.mxu0 %v227
    %303 = vmatprep.subr.mxu0 %v224
    %304 = vmatpush2.msra.mxu0 %v223
    %305 = vmatprep.subr.mxu0 %v220
    %306 = vmatpush2.msra.mxu0 %v219
    %307 = vmatprep.subr.mxu0 %v216
    %308 = vmatpush2.msra.mxu0 %v215
    %309 = vmatprep.subr.mxu0 %v212
    %310 = vmatpush2.msra.mxu0 %v211
    %311 = vmatprep.subr.mxu0 %v208
    %312 = vmatpush2.msra.mxu0 %v207
    %313 = vmatprep.subr.mxu0 %v204
    %314 = vmatpush2.msra.mxu0 %v203
    %315 = vmatprep.subr.mxu0 %v200
    %316 = vmatpush2.msra.mxu0 %v199
    %317 = vmatprep.subr.mxu0 %v196
    %318 = vmatpush2.msra.mxu0 %v195
    %319 = vmatprep.subr.mxu0 %v192
    %320 = vmatpush2.msra.mxu0 %v191
    %321 = vmatprep.subr.mxu0 %v188
    %322 = vmatpush2.msra.mxu0 %v187
    %323 = vmatprep.subr.mxu0 %v184
    %324 = vmatpush2.msra.mxu0 %v183
    %325 = vmatprep.subr.mxu0 %v180
    %326 = vmatpush2.msra.mxu0 %v179
    %327 = vmatprep.subr.mxu0 %v176
    %328 = vmatpush2.msra.mxu0 %v175
    %329 = vmatprep.subr.mxu0 %v172
    %330 = vmatpush2.msra.mxu0 %v171
    %331 = vmatprep.mubr.f32.mxu0 %v106
    %332 = vmatmul.mubr.f32.gmra.mxu0 %v105
    %v333 = vpop.f32.mrf.mxu0
    %v334 = vadd.f32 %v263, %v333
    %v335 = vpop.f32.mrf.mxu0
    %v336 = vadd.f32 %v264, %v335
    %337 = vdwg.mxu0
    %338 = vmatprep.subr.mxu0 %v170
    %339 = vmatpush1.msra.mxu0 %v169
    %340 = vmatprep.subr.mxu0 %v166
    %341 = vmatpush1.msra.mxu0 %v165
    %342 = vmatprep.subr.mxu0 %v162
    %343 = vmatpush1.msra.mxu0 %v161
    %344 = vmatprep.subr.mxu0 %v158
    %345 = vmatpush1.msra.mxu0 %v157
    %346 = vmatprep.subr.mxu0 %v154
    %347 = vmatpush1.msra.mxu0 %v153
    %348 = vmatprep.subr.mxu0 %v150
    %349 = vmatpush1.msra.mxu0 %v149
    %350 = vmatprep.subr.mxu0 %v146
    %351 = vmatpush1.msra.mxu0 %v145
    %352 = vmatprep.subr.mxu0 %v142
    %353 = vmatpush1.msra.mxu0 %v141
    %354 = vmatprep.subr.mxu0 %v138
    %355 = vmatpush1.msra.mxu0 %v137
    %356 = vmatprep.subr.mxu0 %v134
    %357 = vmatpush1.msra.mxu0 %v133
    %358 = vmatprep.subr.mxu0 %v130
    %359 = vmatpush1.msra.mxu0 %v129
    %360 = vmatprep.subr.mxu0 %v126
    %361 = vmatpush1.msra.mxu0 %v125
    %362 = vmatprep.subr.mxu0 %v122
    %363 = vmatpush1.msra.mxu0 %v121
    %364 = vmatprep.subr.mxu0 %v118
    %365 = vmatpush1.msra.mxu0 %v117
    %366 = vmatprep.subr.mxu0 %v114
    %367 = vmatpush1.msra.mxu0 %v113
    %368 = vmatprep.subr.mxu0 %v110
    %369 = vmatpush1.msra.mxu0 %v109
    %370 = vmatprep.subr.mxu0 %v234
    %371 = vmatpush2.msra.mxu0 %v233
    %372 = vmatprep.subr.mxu0 %v230
    %373 = vmatpush2.msra.mxu0 %v229
    %374 = vmatprep.subr.mxu0 %v226
    %375 = vmatpush2.msra.mxu0 %v225
    %376 = vmatprep.subr.mxu0 %v222
    %377 = vmatpush2.msra.mxu0 %v221
    %378 = vmatprep.subr.mxu0 %v218
    %379 = vmatpush2.msra.mxu0 %v217
    %380 = vmatprep.subr.mxu0 %v214
    %381 = vmatpush2.msra.mxu0 %v213
    %382 = vmatprep.subr.mxu0 %v210
    %383 = vmatpush2.msra.mxu0 %v209
    %384 = vmatprep.subr.mxu0 %v206
    %385 = vmatpush2.msra.mxu0 %v205
    %386 = vmatprep.subr.mxu0 %v202
    %387 = vmatpush2.msra.mxu0 %v201
    %388 = vmatprep.subr.mxu0 %v198
    %389 = vmatpush2.msra.mxu0 %v197
    %390 = vmatprep.subr.mxu0 %v194
    %391 = vmatpush2.msra.mxu0 %v193
    %392 = vmatprep.subr.mxu0 %v190
    %393 = vmatpush2.msra.mxu0 %v189
    %394 = vmatprep.subr.mxu0 %v186
    %395 = vmatpush2.msra.mxu0 %v185
    %396 = vmatprep.subr.mxu0 %v182
    %397 = vmatpush2.msra.mxu0 %v181
    %398 = vmatprep.subr.mxu0 %v178
    %399 = vmatpush2.msra.mxu0 %v177
    %400 = vmatprep.subr.mxu0 %v174
    %401 = vmatpush2.msra.mxu0 %v173
    %402 = vmatprep.mubr.f32.mxu0 %v106
    %403 = vmatmul.mubr.f32.gmra.mxu0 %v105
    %v404 = vpop.f32.mrf.mxu0
    %v405 = vadd.f32 %v265, %v404
    %v406 = vpop.f32.mrf.mxu0
    %v407 = vadd.f32 %v266, %v406
    %408 = vdwg.mxu0
    %v409 = vld [vmem:[%s4] sm:$0xf]
    %v411 = vlaneseq
    %v412 = vshrl.u32 %v411, 7
    %v413 = vsub.s32 0, %v412
    %v414 = vrot.slane %v409, %v413
    %v415 = vlaneseq
    %v416 = vshrl.u32 %v415, 7
    %v417 = vsub.s32 1, %v416
    %v418 = vrot.slane %v409, %v417
    %v419 = vlaneseq
    %v420 = vshrl.u32 %v419, 7
    %v421 = vsub.s32 2, %v420
    %v422 = vrot.slane %v409, %v421
    %v423 = vlaneseq
    %v424 = vshrl.u32 %v423, 7
    %v425 = vsub.s32 3, %v424
    %v426 = vrot.slane %v409, %v425
    %v431 = vadd.f32 %v334, %v414
    %v432 = vadd.f32 %v336, %v418
    %v433 = vadd.f32 %v405, %v422
    %v434 = vadd.f32 %v407, %v426
    %v435 = vmul.f32 %v431, 0.01
    %v436 = vmul.f32 %v432, 0.01
    %v437 = vmul.f32 %v433, 0.01
    %v438 = vmul.f32 %v434, 0.01
    %v439 = vmax.f32 %v431, %v435
    %v440 = vmax.f32 %v432, %v436
    %v441 = vmax.f32 %v433, %v437
    %v442 = vmax.f32 %v434, %v438
    %v443 = vld [vmem:[#allocation7] sm:$0xff]
    %v444 = vld [vmem:[#allocation7 + $0x8] sm:$0xff]
    %v445 = vld [vmem:[#allocation7 + $0x10] sm:$0xff]
    %v446 = vld [vmem:[#allocation7 + $0x18] sm:$0xff]
    %v447 = vld [vmem:[#allocation7 + $0x20] sm:$0xff]
    %v448 = vld [vmem:[#allocation7 + $0x28] sm:$0xff]
    %v449 = vld [vmem:[#allocation7 + $0x30] sm:$0xff]
    %v450 = vld [vmem:[#allocation7 + $0x38] sm:$0xff]
    %v451 = vld [vmem:[#allocation7 + $0x40] sm:$0xff]
    %v452 = vld [vmem:[#allocation7 + $0x48] sm:$0xff]
    %v453 = vld [vmem:[#allocation7 + $0x50] sm:$0xff]
    %v454 = vld [vmem:[#allocation7 + $0x58] sm:$0xff]
    %v455 = vld [vmem:[#allocation7 + $0x60] sm:$0xff]
    %v456 = vld [vmem:[#allocation7 + $0x68] sm:$0xff]
    %v457 = vld [vmem:[#allocation7 + $0x70] sm:$0xff]
    %v458 = vld [vmem:[#allocation7 + $0x78] sm:$0xff]
    %v459 = vld [vmem:[#allocation7 + $0x80] sm:$0xff]
    %v460 = vld [vmem:[#allocation7 + $0x88] sm:$0xff]
    %v461 = vld [vmem:[#allocation7 + $0x90] sm:$0xff]
    %v462 = vld [vmem:[#allocation7 + $0x98] sm:$0xff]
    %v463 = vld [vmem:[#allocation7 + $0xa0] sm:$0xff]
    %v464 = vld [vmem:[#allocation7 + $0xa8] sm:$0xff]
    %v465 = vld [vmem:[#allocation7 + $0xb0] sm:$0xff]
    %v466 = vld [vmem:[#allocation7 + $0xb8] sm:$0xff]
    %v467 = vld [vmem:[#allocation7 + $0xc0] sm:$0xff]
    %v468 = vld [vmem:[#allocation7 + $0xc8] sm:$0xff]
    %v469 = vld [vmem:[#allocation7 + $0xd0] sm:$0xff]
    %v470 = vld [vmem:[#allocation7 + $0xd8] sm:$0xff]
    %v471 = vld [vmem:[#allocation7 + $0xe0] sm:$0xff]
    %v472 = vld [vmem:[#allocation7 + $0xe8] sm:$0xff]
    %v473 = vld [vmem:[#allocation7 + $0xf0] sm:$0xff]
    %v474 = vld [vmem:[#allocation7 + $0xf8] sm:$0xff]
    %v475 = vld [vmem:[#allocation7 + $0x100] sm:$0xff]
    %v476 = vld [vmem:[#allocation7 + $0x108] sm:$0xff]
    %v477 = vld [vmem:[#allocation7 + $0x110] sm:$0xff]
    %v478 = vld [vmem:[#allocation7 + $0x118] sm:$0xff]
    %v479 = vld [vmem:[#allocation7 + $0x120] sm:$0xff]
    %v480 = vld [vmem:[#allocation7 + $0x128] sm:$0xff]
    %v481 = vld [vmem:[#allocation7 + $0x130] sm:$0xff]
    %v482 = vld [vmem:[#allocation7 + $0x138] sm:$0xff]
    %v483 = vld [vmem:[#allocation7 + $0x140] sm:$0xff]
    %v484 = vld [vmem:[#allocation7 + $0x148] sm:$0xff]
    %v485 = vld [vmem:[#allocation7 + $0x150] sm:$0xff]
    %v486 = vld [vmem:[#allocation7 + $0x158] sm:$0xff]
    %v487 = vld [vmem:[#allocation7 + $0x160] sm:$0xff]
    %v488 = vld [vmem:[#allocation7 + $0x168] sm:$0xff]
    %v489 = vld [vmem:[#allocation7 + $0x170] sm:$0xff]
    %v490 = vld [vmem:[#allocation7 + $0x178] sm:$0xff]
    %v491 = vld [vmem:[#allocation7 + $0x180] sm:$0xff]
    %v492 = vld [vmem:[#allocation7 + $0x188] sm:$0xff]
    %v493 = vld [vmem:[#allocation7 + $0x190] sm:$0xff]
    %v494 = vld [vmem:[#allocation7 + $0x198] sm:$0xff]
    %v495 = vld [vmem:[#allocation7 + $0x1a0] sm:$0xff]
    %v496 = vld [vmem:[#allocation7 + $0x1a8] sm:$0xff]
    %v497 = vld [vmem:[#allocation7 + $0x1b0] sm:$0xff]
    %v498 = vld [vmem:[#allocation7 + $0x1b8] sm:$0xff]
    %v499 = vld [vmem:[#allocation7 + $0x1c0] sm:$0xff]
    %v500 = vld [vmem:[#allocation7 + $0x1c8] sm:$0xff]
    %v501 = vld [vmem:[#allocation7 + $0x1d0] sm:$0xff]
    %v502 = vld [vmem:[#allocation7 + $0x1d8] sm:$0xff]
    %v503 = vld [vmem:[#allocation7 + $0x1e0] sm:$0xff]
    %v504 = vld [vmem:[#allocation7 + $0x1e8] sm:$0xff]
    %v505 = vld [vmem:[#allocation7 + $0x1f0] sm:$0xff]
    %v506 = vld [vmem:[#allocation7 + $0x1f8] sm:$0xff]
    %v507 = vld [vmem:[#allocation7 + $0x200] sm:$0xff]
    %v508 = vld [vmem:[#allocation7 + $0x208] sm:$0xff]
    %v509 = vld [vmem:[#allocation7 + $0x210] sm:$0xff]
    %v510 = vld [vmem:[#allocation7 + $0x218] sm:$0xff]
    %v511 = vld [vmem:[#allocation7 + $0x220] sm:$0xff]
    %v512 = vld [vmem:[#allocation7 + $0x228] sm:$0xff]
    %v513 = vld [vmem:[#allocation7 + $0x230] sm:$0xff]
    %v514 = vld [vmem:[#allocation7 + $0x238] sm:$0xff]
    %v515 = vld [vmem:[#allocation7 + $0x240] sm:$0xff]
    %v516 = vld [vmem:[#allocation7 + $0x248] sm:$0xff]
    %v517 = vld [vmem:[#allocation7 + $0x250] sm:$0xff]
    %v518 = vld [vmem:[#allocation7 + $0x258] sm:$0xff]
    %v519 = vld [vmem:[#allocation7 + $0x260] sm:$0xff]
    %v520 = vld [vmem:[#allocation7 + $0x268] sm:$0xff]
    %v521 = vld [vmem:[#allocation7 + $0x270] sm:$0xff]
    %v522 = vld [vmem:[#allocation7 + $0x278] sm:$0xff]
    %v523 = vld [vmem:[#allocation7 + $0x280] sm:$0xff]
    %v524 = vld [vmem:[#allocation7 + $0x288] sm:$0xff]
    %v525 = vld [vmem:[#allocation7 + $0x290] sm:$0xff]
    %v526 = vld [vmem:[#allocation7 + $0x298] sm:$0xff]
    %v527 = vld [vmem:[#allocation7 + $0x2a0] sm:$0xff]
    %v528 = vld [vmem:[#allocation7 + $0x2a8] sm:$0xff]
    %v529 = vld [vmem:[#allocation7 + $0x2b0] sm:$0xff]
    %v530 = vld [vmem:[#allocation7 + $0x2b8] sm:$0xff]
    %v531 = vld [vmem:[#allocation7 + $0x2c0] sm:$0xff]
    %v532 = vld [vmem:[#allocation7 + $0x2c8] sm:$0xff]
    %v533 = vld [vmem:[#allocation7 + $0x2d0] sm:$0xff]
    %v534 = vld [vmem:[#allocation7 + $0x2d8] sm:$0xff]
    %v535 = vld [vmem:[#allocation7 + $0x2e0] sm:$0xff]
    %v536 = vld [vmem:[#allocation7 + $0x2e8] sm:$0xff]
    %v537 = vld [vmem:[#allocation7 + $0x2f0] sm:$0xff]
    %v538 = vld [vmem:[#allocation7 + $0x2f8] sm:$0xff]
    %v539 = vld [vmem:[#allocation7 + $0x300] sm:$0xff]
    %v540 = vld [vmem:[#allocation7 + $0x308] sm:$0xff]
    %v541 = vld [vmem:[#allocation7 + $0x310] sm:$0xff]
    %v542 = vld [vmem:[#allocation7 + $0x318] sm:$0xff]
    %v543 = vld [vmem:[#allocation7 + $0x320] sm:$0xff]
    %v544 = vld [vmem:[#allocation7 + $0x328] sm:$0xff]
    %v545 = vld [vmem:[#allocation7 + $0x330] sm:$0xff]
    %v546 = vld [vmem:[#allocation7 + $0x338] sm:$0xff]
    %v547 = vld [vmem:[#allocation7 + $0x340] sm:$0xff]
    %v548 = vld [vmem:[#allocation7 + $0x348] sm:$0xff]
    %v549 = vld [vmem:[#allocation7 + $0x350] sm:$0xff]
    %v550 = vld [vmem:[#allocation7 + $0x358] sm:$0xff]
    %v551 = vld [vmem:[#allocation7 + $0x360] sm:$0xff]
    %v552 = vld [vmem:[#allocation7 + $0x368] sm:$0xff]
    %v553 = vld [vmem:[#allocation7 + $0x370] sm:$0xff]
    %v554 = vld [vmem:[#allocation7 + $0x378] sm:$0xff]
    %v555 = vld [vmem:[#allocation7 + $0x380] sm:$0xff]
    %v556 = vld [vmem:[#allocation7 + $0x388] sm:$0xff]
    %v557 = vld [vmem:[#allocation7 + $0x390] sm:$0xff]
    %v558 = vld [vmem:[#allocation7 + $0x398] sm:$0xff]
    %v559 = vld [vmem:[#allocation7 + $0x3a0] sm:$0xff]
    %v560 = vld [vmem:[#allocation7 + $0x3a8] sm:$0xff]
    %v561 = vld [vmem:[#allocation7 + $0x3b0] sm:$0xff]
    %v562 = vld [vmem:[#allocation7 + $0x3b8] sm:$0xff]
    %v563 = vld [vmem:[#allocation7 + $0x3c0] sm:$0xff]
    %v564 = vld [vmem:[#allocation7 + $0x3c8] sm:$0xff]
    %v565 = vld [vmem:[#allocation7 + $0x3d0] sm:$0xff]
    %v566 = vld [vmem:[#allocation7 + $0x3d8] sm:$0xff]
    %v567 = vld [vmem:[#allocation7 + $0x3e0] sm:$0xff]
    %v568 = vld [vmem:[#allocation7 + $0x3e8] sm:$0xff]
    %v569 = vld [vmem:[#allocation7 + $0x3f0] sm:$0xff]
    %v570 = vld [vmem:[#allocation7 + $0x3f8] sm:$0xff]
    %v571 = vld [vmem:[#allocation7 + $0x400] sm:$0xff]
    %v572 = vld [vmem:[#allocation7 + $0x408] sm:$0xff]
    %v573 = vld [vmem:[#allocation7 + $0x410] sm:$0xff]
    %v574 = vld [vmem:[#allocation7 + $0x418] sm:$0xff]
    %v575 = vld [vmem:[#allocation7 + $0x420] sm:$0xff]
    %v576 = vld [vmem:[#allocation7 + $0x428] sm:$0xff]
    %v577 = vld [vmem:[#allocation7 + $0x430] sm:$0xff]
    %v578 = vld [vmem:[#allocation7 + $0x438] sm:$0xff]
    %v579 = vld [vmem:[#allocation7 + $0x440] sm:$0xff]
    %v580 = vld [vmem:[#allocation7 + $0x448] sm:$0xff]
    %v581 = vld [vmem:[#allocation7 + $0x450] sm:$0xff]
    %v582 = vld [vmem:[#allocation7 + $0x458] sm:$0xff]
    %v583 = vld [vmem:[#allocation7 + $0x460] sm:$0xff]
    %v584 = vld [vmem:[#allocation7 + $0x468] sm:$0xff]
    %v585 = vld [vmem:[#allocation7 + $0x470] sm:$0xff]
    %v586 = vld [vmem:[#allocation7 + $0x478] sm:$0xff]
    %v587 = vld [vmem:[#allocation7 + $0x480] sm:$0xff]
    %v588 = vld [vmem:[#allocation7 + $0x488] sm:$0xff]
    %v589 = vld [vmem:[#allocation7 + $0x490] sm:$0xff]
    %v590 = vld [vmem:[#allocation7 + $0x498] sm:$0xff]
    %v591 = vld [vmem:[#allocation7 + $0x4a0] sm:$0xff]
    %v592 = vld [vmem:[#allocation7 + $0x4a8] sm:$0xff]
    %v593 = vld [vmem:[#allocation7 + $0x4b0] sm:$0xff]
    %v594 = vld [vmem:[#allocation7 + $0x4b8] sm:$0xff]
    %v595 = vld [vmem:[#allocation7 + $0x4c0] sm:$0xff]
    %v596 = vld [vmem:[#allocation7 + $0x4c8] sm:$0xff]
    %v597 = vld [vmem:[#allocation7 + $0x4d0] sm:$0xff]
    %v598 = vld [vmem:[#allocation7 + $0x4d8] sm:$0xff]
    %v599 = vld [vmem:[#allocation7 + $0x4e0] sm:$0xff]
    %v600 = vld [vmem:[#allocation7 + $0x4e8] sm:$0xff]
    %v601 = vld [vmem:[#allocation7 + $0x4f0] sm:$0xff]
    %v602 = vld [vmem:[#allocation7 + $0x4f8] sm:$0xff]
    %v603 = vld [vmem:[#allocation7 + $0x500] sm:$0xff]
    %v604 = vld [vmem:[#allocation7 + $0x508] sm:$0xff]
    %v605 = vld [vmem:[#allocation7 + $0x510] sm:$0xff]
    %v606 = vld [vmem:[#allocation7 + $0x518] sm:$0xff]
    %v607 = vld [vmem:[#allocation7 + $0x520] sm:$0xff]
    %v608 = vld [vmem:[#allocation7 + $0x528] sm:$0xff]
    %v609 = vld [vmem:[#allocation7 + $0x530] sm:$0xff]
    %v610 = vld [vmem:[#allocation7 + $0x538] sm:$0xff]
    %v611 = vld [vmem:[#allocation7 + $0x540] sm:$0xff]
    %v612 = vld [vmem:[#allocation7 + $0x548] sm:$0xff]
    %v613 = vld [vmem:[#allocation7 + $0x550] sm:$0xff]
    %v614 = vld [vmem:[#allocation7 + $0x558] sm:$0xff]
    %v615 = vld [vmem:[#allocation7 + $0x560] sm:$0xff]
    %v616 = vld [vmem:[#allocation7 + $0x568] sm:$0xff]
    %v617 = vld [vmem:[#allocation7 + $0x570] sm:$0xff]
    %v618 = vld [vmem:[#allocation7 + $0x578] sm:$0xff]
    %v619 = vld [vmem:[#allocation7 + $0x580] sm:$0xff]
    %v620 = vld [vmem:[#allocation7 + $0x588] sm:$0xff]
    %v621 = vld [vmem:[#allocation7 + $0x590] sm:$0xff]
    %v622 = vld [vmem:[#allocation7 + $0x598] sm:$0xff]
    %v623 = vld [vmem:[#allocation7 + $0x5a0] sm:$0xff]
    %v624 = vld [vmem:[#allocation7 + $0x5a8] sm:$0xff]
    %v625 = vld [vmem:[#allocation7 + $0x5b0] sm:$0xff]
    %v626 = vld [vmem:[#allocation7 + $0x5b8] sm:$0xff]
    %v627 = vld [vmem:[#allocation7 + $0x5c0] sm:$0xff]
    %v628 = vld [vmem:[#allocation7 + $0x5c8] sm:$0xff]
    %v629 = vld [vmem:[#allocation7 + $0x5d0] sm:$0xff]
    %v630 = vld [vmem:[#allocation7 + $0x5d8] sm:$0xff]
    %v631 = vld [vmem:[#allocation7 + $0x5e0] sm:$0xff]
    %v632 = vld [vmem:[#allocation7 + $0x5e8] sm:$0xff]
    %v633 = vld [vmem:[#allocation7 + $0x5f0] sm:$0xff]
    %v634 = vld [vmem:[#allocation7 + $0x5f8] sm:$0xff]
    %v635 = vld [vmem:[#allocation7 + $0x600] sm:$0xff]
    %v636 = vld [vmem:[#allocation7 + $0x608] sm:$0xff]
    %v637 = vld [vmem:[#allocation7 + $0x610] sm:$0xff]
    %v638 = vld [vmem:[#allocation7 + $0x618] sm:$0xff]
    %v639 = vld [vmem:[#allocation7 + $0x620] sm:$0xff]
    %v640 = vld [vmem:[#allocation7 + $0x628] sm:$0xff]
    %v641 = vld [vmem:[#allocation7 + $0x630] sm:$0xff]
    %v642 = vld [vmem:[#allocation7 + $0x638] sm:$0xff]
    %v643 = vld [vmem:[#allocation7 + $0x640] sm:$0xff]
    %v644 = vld [vmem:[#allocation7 + $0x648] sm:$0xff]
    %v645 = vld [vmem:[#allocation7 + $0x650] sm:$0xff]
    %v646 = vld [vmem:[#allocation7 + $0x658] sm:$0xff]
    %v647 = vld [vmem:[#allocation7 + $0x660] sm:$0xff]
    %v648 = vld [vmem:[#allocation7 + $0x668] sm:$0xff]
    %v649 = vld [vmem:[#allocation7 + $0x670] sm:$0xff]
    %v650 = vld [vmem:[#allocation7 + $0x678] sm:$0xff]
    %v651 = vld [vmem:[#allocation7 + $0x680] sm:$0xff]
    %v652 = vld [vmem:[#allocation7 + $0x688] sm:$0xff]
    %v653 = vld [vmem:[#allocation7 + $0x690] sm:$0xff]
    %v654 = vld [vmem:[#allocation7 + $0x698] sm:$0xff]
    %v655 = vld [vmem:[#allocation7 + $0x6a0] sm:$0xff]
    %v656 = vld [vmem:[#allocation7 + $0x6a8] sm:$0xff]
    %v657 = vld [vmem:[#allocation7 + $0x6b0] sm:$0xff]
    %v658 = vld [vmem:[#allocation7 + $0x6b8] sm:$0xff]
    %v659 = vld [vmem:[#allocation7 + $0x6c0] sm:$0xff]
    %v660 = vld [vmem:[#allocation7 + $0x6c8] sm:$0xff]
    %v661 = vld [vmem:[#allocation7 + $0x6d0] sm:$0xff]
    %v662 = vld [vmem:[#allocation7 + $0x6d8] sm:$0xff]
    %v663 = vld [vmem:[#allocation7 + $0x6e0] sm:$0xff]
    %v664 = vld [vmem:[#allocation7 + $0x6e8] sm:$0xff]
    %v665 = vld [vmem:[#allocation7 + $0x6f0] sm:$0xff]
    %v666 = vld [vmem:[#allocation7 + $0x6f8] sm:$0xff]
    %v667 = vld [vmem:[#allocation7 + $0x700] sm:$0xff]
    %v668 = vld [vmem:[#allocation7 + $0x708] sm:$0xff]
    %v669 = vld [vmem:[#allocation7 + $0x710] sm:$0xff]
    %v670 = vld [vmem:[#allocation7 + $0x718] sm:$0xff]
    %v671 = vld [vmem:[#allocation7 + $0x720] sm:$0xff]
    %v672 = vld [vmem:[#allocation7 + $0x728] sm:$0xff]
    %v673 = vld [vmem:[#allocation7 + $0x730] sm:$0xff]
    %v674 = vld [vmem:[#allocation7 + $0x738] sm:$0xff]
    %v675 = vld [vmem:[#allocation7 + $0x740] sm:$0xff]
    %v676 = vld [vmem:[#allocation7 + $0x748] sm:$0xff]
    %v677 = vld [vmem:[#allocation7 + $0x750] sm:$0xff]
    %v678 = vld [vmem:[#allocation7 + $0x758] sm:$0xff]
    %v679 = vld [vmem:[#allocation7 + $0x760] sm:$0xff]
    %v680 = vld [vmem:[#allocation7 + $0x768] sm:$0xff]
    %v681 = vld [vmem:[#allocation7 + $0x770] sm:$0xff]
    %v682 = vld [vmem:[#allocation7 + $0x778] sm:$0xff]
    %v683 = vld [vmem:[#allocation7 + $0x780] sm:$0xff]
    %v684 = vld [vmem:[#allocation7 + $0x788] sm:$0xff]
    %v685 = vld [vmem:[#allocation7 + $0x790] sm:$0xff]
    %v686 = vld [vmem:[#allocation7 + $0x798] sm:$0xff]
    %v687 = vld [vmem:[#allocation7 + $0x7a0] sm:$0xff]
    %v688 = vld [vmem:[#allocation7 + $0x7a8] sm:$0xff]
    %v689 = vld [vmem:[#allocation7 + $0x7b0] sm:$0xff]
    %v690 = vld [vmem:[#allocation7 + $0x7b8] sm:$0xff]
    %v691 = vld [vmem:[#allocation7 + $0x7c0] sm:$0xff]
    %v692 = vld [vmem:[#allocation7 + $0x7c8] sm:$0xff]
    %v693 = vld [vmem:[#allocation7 + $0x7d0] sm:$0xff]
    %v694 = vld [vmem:[#allocation7 + $0x7d8] sm:$0xff]
    %v695 = vld [vmem:[#allocation7 + $0x7e0] sm:$0xff]
    %v696 = vld [vmem:[#allocation7 + $0x7e8] sm:$0xff]
    %v697 = vld [vmem:[#allocation7 + $0x7f0] sm:$0xff]
    %v698 = vld [vmem:[#allocation7 + $0x7f8] sm:$0xff]
    %v699 = vld [vmem:[%s6] sm:$0xf]
    %v701 = vlaneseq
    %v702 = vshrl.u32 %v701, 7
    %v703 = vsub.s32 0, %v702
    %v704 = vrot.slane %v699, %v703
    %v705 = vlaneseq
    %v706 = vshrl.u32 %v705, 7
    %v707 = vsub.s32 1, %v706
    %v708 = vrot.slane %v699, %v707
    %v709 = vlaneseq
    %v710 = vshrl.u32 %v709, 7
    %v711 = vsub.s32 2, %v710
    %v712 = vrot.slane %v699, %v711
    %v713 = vlaneseq
    %v714 = vshrl.u32 %v713, 7
    %v715 = vsub.s32 3, %v714
    %v716 = vrot.slane %v699, %v715
    %721 = vmatprep.subr.mxu0 %v504
    %722 = vmatpush1.msra.mxu0 %v503
    %723 = vmatprep.subr.mxu0 %v500
    %724 = vmatpush1.msra.mxu0 %v499
    %725 = vmatprep.subr.mxu0 %v496
    %726 = vmatpush1.msra.mxu0 %v495
    %727 = vmatprep.subr.mxu0 %v492
    %728 = vmatpush1.msra.mxu0 %v491
    %729 = vmatprep.subr.mxu0 %v488
    %730 = vmatpush1.msra.mxu0 %v487
    %731 = vmatprep.subr.mxu0 %v484
    %732 = vmatpush1.msra.mxu0 %v483
    %733 = vmatprep.subr.mxu0 %v480
    %734 = vmatpush1.msra.mxu0 %v479
    %735 = vmatprep.subr.mxu0 %v476
    %736 = vmatpush1.msra.mxu0 %v475
    %737 = vmatprep.subr.mxu0 %v472
    %738 = vmatpush1.msra.mxu0 %v471
    %739 = vmatprep.subr.mxu0 %v468
    %740 = vmatpush1.msra.mxu0 %v467
    %741 = vmatprep.subr.mxu0 %v464
    %742 = vmatpush1.msra.mxu0 %v463
    %743 = vmatprep.subr.mxu0 %v460
    %744 = vmatpush1.msra.mxu0 %v459
    %745 = vmatprep.subr.mxu0 %v456
    %746 = vmatpush1.msra.mxu0 %v455
    %747 = vmatprep.subr.mxu0 %v452
    %748 = vmatpush1.msra.mxu0 %v451
    %749 = vmatprep.subr.mxu0 %v448
    %750 = vmatpush1.msra.mxu0 %v447
    %751 = vmatprep.subr.mxu0 %v444
    %752 = vmatpush1.msra.mxu0 %v443
    %753 = vmatprep.subr.mxu0 %v568
    %754 = vmatpush2.msra.mxu0 %v567
    %755 = vmatprep.subr.mxu0 %v564
    %756 = vmatpush2.msra.mxu0 %v563
    %757 = vmatprep.subr.mxu0 %v560
    %758 = vmatpush2.msra.mxu0 %v559
    %759 = vmatprep.subr.mxu0 %v556
    %760 = vmatpush2.msra.mxu0 %v555
    %761 = vmatprep.subr.mxu0 %v552
    %762 = vmatpush2.msra.mxu0 %v551
    %763 = vmatprep.subr.mxu0 %v548
    %764 = vmatpush2.msra.mxu0 %v547
    %765 = vmatprep.subr.mxu0 %v544
    %766 = vmatpush2.msra.mxu0 %v543
    %767 = vmatprep.subr.mxu0 %v540
    %768 = vmatpush2.msra.mxu0 %v539
    %769 = vmatprep.subr.mxu0 %v536
    %770 = vmatpush2.msra.mxu0 %v535
    %771 = vmatprep.subr.mxu0 %v532
    %772 = vmatpush2.msra.mxu0 %v531
    %773 = vmatprep.subr.mxu0 %v528
    %774 = vmatpush2.msra.mxu0 %v527
    %775 = vmatprep.subr.mxu0 %v524
    %776 = vmatpush2.msra.mxu0 %v523
    %777 = vmatprep.subr.mxu0 %v520
    %778 = vmatpush2.msra.mxu0 %v519
    %779 = vmatprep.subr.mxu0 %v516
    %780 = vmatpush2.msra.mxu0 %v515
    %781 = vmatprep.subr.mxu0 %v512
    %782 = vmatpush2.msra.mxu0 %v511
    %783 = vmatprep.subr.mxu0 %v508
    %784 = vmatpush2.msra.mxu0 %v507
    %785 = vmatprep.mubr.f32.mxu0 %v440
    %786 = vmatmul.mubr.f32.gmra.mxu0 %v439
    %v787 = vpop.f32.mrf.mxu0
    %v788 = vadd.f32 %v704, %v787
    %v789 = vpop.f32.mrf.mxu0
    %v790 = vadd.f32 %v708, %v789
    %791 = vdwg.mxu0
    %792 = vmatprep.subr.mxu0 %v632
    %793 = vmatpush1.msra.mxu0 %v631
    %794 = vmatprep.subr.mxu0 %v628
    %795 = vmatpush1.msra.mxu0 %v627
    %796 = vmatprep.subr.mxu0 %v624
    %797 = vmatpush1.msra.mxu0 %v623
    %798 = vmatprep.subr.mxu0 %v620
    %799 = vmatpush1.msra.mxu0 %v619
    %800 = vmatprep.subr.mxu0 %v616
    %801 = vmatpush1.msra.mxu0 %v615
    %802 = vmatprep.subr.mxu0 %v612
    %803 = vmatpush1.msra.mxu0 %v611
    %804 = vmatprep.subr.mxu0 %v608
    %805 = vmatpush1.msra.mxu0 %v607
    %806 = vmatprep.subr.mxu0 %v604
    %807 = vmatpush1.msra.mxu0 %v603
    %808 = vmatprep.subr.mxu0 %v600
    %809 = vmatpush1.msra.mxu0 %v599
    %810 = vmatprep.subr.mxu0 %v596
    %811 = vmatpush1.msra.mxu0 %v595
    %812 = vmatprep.subr.mxu0 %v592
    %813 = vmatpush1.msra.mxu0 %v591
    %814 = vmatprep.subr.mxu0 %v588
    %815 = vmatpush1.msra.mxu0 %v587
    %816 = vmatprep.subr.mxu0 %v584
    %817 = vmatpush1.msra.mxu0 %v583
    %818 = vmatprep.subr.mxu0 %v580
    %819 = vmatpush1.msra.mxu0 %v579
    %820 = vmatprep.subr.mxu0 %v576
    %821 = vmatpush1.msra.mxu0 %v575
    %822 = vmatprep.subr.mxu0 %v572
    %823 = vmatpush1.msra.mxu0 %v571
    %824 = vmatprep.subr.mxu0 %v696
    %825 = vmatpush2.msra.mxu0 %v695
    %826 = vmatprep.subr.mxu0 %v692
    %827 = vmatpush2.msra.mxu0 %v691
    %828 = vmatprep.subr.mxu0 %v688
    %829 = vmatpush2.msra.mxu0 %v687
    %830 = vmatprep.subr.mxu0 %v684
    %831 = vmatpush2.msra.mxu0 %v683
    %832 = vmatprep.subr.mxu0 %v680
    %833 = vmatpush2.msra.mxu0 %v679
    %834 = vmatprep.subr.mxu0 %v676
    %835 = vmatpush2.msra.mxu0 %v675
    %836 = vmatprep.subr.mxu0 %v672
    %837 = vmatpush2.msra.mxu0 %v671
    %838 = vmatprep.subr.mxu0 %v668
    %839 = vmatpush2.msra.mxu0 %v667
    %840 = vmatprep.subr.mxu0 %v664
    %841 = vmatpush2.msra.mxu0 %v663
    %842 = vmatprep.subr.mxu0 %v660
    %843 = vmatpush2.msra.mxu0 %v659
    %844 = vmatprep.subr.mxu0 %v656
    %845 = vmatpush2.msra.mxu0 %v655
    %846 = vmatprep.subr.mxu0 %v652
    %847 = vmatpush2.msra.mxu0 %v651
    %848 = vmatprep.subr.mxu0 %v648
    %849 = vmatpush2.msra.mxu0 %v647
    %850 = vmatprep.subr.mxu0 %v644
    %851 = vmatpush2.msra.mxu0 %v643
    %852 = vmatprep.subr.mxu0 %v640
    %853 = vmatpush2.msra.mxu0 %v639
    %854 = vmatprep.subr.mxu0 %v636
    %855 = vmatpush2.msra.mxu0 %v635
    %856 = vmatprep.mubr.f32.mxu0 %v442
    %857 = vmatmul.mubr.f32.gmra.mxu0 %v441
    %v858 = vpop.f32.mrf.mxu0
    %v859 = vadd.f32 %v788, %v858
    %v860 = vpop.f32.mrf.mxu0
    %v861 = vadd.f32 %v790, %v860
    %862 = vdwg.mxu0
    %863 = vmatprep.subr.mxu0 %v506
    %864 = vmatpush1.msra.mxu0 %v505
    %865 = vmatprep.subr.mxu0 %v502
    %866 = vmatpush1.msra.mxu0 %v501
    %867 = vmatprep.subr.mxu0 %v498
    %868 = vmatpush1.msra.mxu0 %v497
    %869 = vmatprep.subr.mxu0 %v494
    %870 = vmatpush1.msra.mxu0 %v493
    %871 = vmatprep.subr.mxu0 %v490
    %872 = vmatpush1.msra.mxu0 %v489
    %873 = vmatprep.subr.mxu0 %v486
    %874 = vmatpush1.msra.mxu0 %v485
    %875 = vmatprep.subr.mxu0 %v482
    %876 = vmatpush1.msra.mxu0 %v481
    %877 = vmatprep.subr.mxu0 %v478
    %878 = vmatpush1.msra.mxu0 %v477
    %879 = vmatprep.subr.mxu0 %v474
    %880 = vmatpush1.msra.mxu0 %v473
    %881 = vmatprep.subr.mxu0 %v470
    %882 = vmatpush1.msra.mxu0 %v469
    %883 = vmatprep.subr.mxu0 %v466
    %884 = vmatpush1.msra.mxu0 %v465
    %885 = vmatprep.subr.mxu0 %v462
    %886 = vmatpush1.msra.mxu0 %v461
    %887 = vmatprep.subr.mxu0 %v458
    %888 = vmatpush1.msra.mxu0 %v457
    %889 = vmatprep.subr.mxu0 %v454
    %890 = vmatpush1.msra.mxu0 %v453
    %891 = vmatprep.subr.mxu0 %v450
    %892 = vmatpush1.msra.mxu0 %v449
    %893 = vmatprep.subr.mxu0 %v446
    %894 = vmatpush1.msra.mxu0 %v445
    %895 = vmatprep.subr.mxu0 %v570
    %896 = vmatpush2.msra.mxu0 %v569
    %897 = vmatprep.subr.mxu0 %v566
    %898 = vmatpush2.msra.mxu0 %v565
    %899 = vmatprep.subr.mxu0 %v562
    %900 = vmatpush2.msra.mxu0 %v561
    %901 = vmatprep.subr.mxu0 %v558
    %902 = vmatpush2.msra.mxu0 %v557
    %903 = vmatprep.subr.mxu0 %v554
    %904 = vmatpush2.msra.mxu0 %v553
    %905 = vmatprep.subr.mxu0 %v550
    %906 = vmatpush2.msra.mxu0 %v549
    %907 = vmatprep.subr.mxu0 %v546
    %908 = vmatpush2.msra.mxu0 %v545
    %909 = vmatprep.subr.mxu0 %v542
    %910 = vmatpush2.msra.mxu0 %v541
    %911 = vmatprep.subr.mxu0 %v538
    %912 = vmatpush2.msra.mxu0 %v537
    %913 = vmatprep.subr.mxu0 %v534
    %914 = vmatpush2.msra.mxu0 %v533
    %915 = vmatprep.subr.mxu0 %v530
    %916 = vmatpush2.msra.mxu0 %v529
    %917 = vmatprep.subr.mxu0 %v526
    %918 = vmatpush2.msra.mxu0 %v525
    %919 = vmatprep.subr.mxu0 %v522
    %920 = vmatpush2.msra.mxu0 %v521
    %921 = vmatprep.subr.mxu0 %v518
    %922 = vmatpush2.msra.mxu0 %v517
    %923 = vmatprep.subr.mxu0 %v514
    %924 = vmatpush2.msra.mxu0 %v513
    %925 = vmatprep.subr.mxu0 %v510
    %926 = vmatpush2.msra.mxu0 %v509
    %927 = vmatprep.mubr.f32.mxu0 %v440
    %928 = vmatmul.mubr.f32.gmra.mxu0 %v439
    %v929 = vpop.f32.mrf.mxu0
    %v930 = vadd.f32 %v712, %v929
    %v931 = vpop.f32.mrf.mxu0
    %v932 = vadd.f32 %v716, %v931
    %933 = vdwg.mxu0
    %934 = vmatprep.subr.mxu0 %v634
    %935 = vmatpush1.msra.mxu0 %v633
    %936 = vmatprep.subr.mxu0 %v630
    %937 = vmatpush1.msra.mxu0 %v629
    %938 = vmatprep.subr.mxu0 %v626
    %939 = vmatpush1.msra.mxu0 %v625
    %940 = vmatprep.subr.mxu0 %v622
    %941 = vmatpush1.msra.mxu0 %v621
    %942 = vmatprep.subr.mxu0 %v618
    %943 = vmatpush1.msra.mxu0 %v617
    %944 = vmatprep.subr.mxu0 %v614
    %945 = vmatpush1.msra.mxu0 %v613
    %946 = vmatprep.subr.mxu0 %v610
    %947 = vmatpush1.msra.mxu0 %v609
    %948 = vmatprep.subr.mxu0 %v606
    %949 = vmatpush1.msra.mxu0 %v605
    %950 = vmatprep.subr.mxu0 %v602
    %951 = vmatpush1.msra.mxu0 %v601
    %952 = vmatprep.subr.mxu0 %v598
    %953 = vmatpush1.msra.mxu0 %v597
    %954 = vmatprep.subr.mxu0 %v594
    %955 = vmatpush1.msra.mxu0 %v593
    %956 = vmatprep.subr.mxu0 %v590
    %957 = vmatpush1.msra.mxu0 %v589
    %958 = vmatprep.subr.mxu0 %v586
    %959 = vmatpush1.msra.mxu0 %v585
    %960 = vmatprep.subr.mxu0 %v582
    %961 = vmatpush1.msra.mxu0 %v581
    %962 = vmatprep.subr.mxu0 %v578
    %963 = vmatpush1.msra.mxu0 %v577
    %964 = vmatprep.subr.mxu0 %v574
    %965 = vmatpush1.msra.mxu0 %v573
    %966 = vmatprep.subr.mxu0 %v698
    %967 = vmatpush2.msra.mxu0 %v697
    %968 = vmatprep.subr.mxu0 %v694
    %969 = vmatpush2.msra.mxu0 %v693
    %970 = vmatprep.subr.mxu0 %v690
    %971 = vmatpush2.msra.mxu0 %v689
    %972 = vmatprep.subr.mxu0 %v686
    %973 = vmatpush2.msra.mxu0 %v685
    %974 = vmatprep.subr.mxu0 %v682
    %975 = vmatpush2.msra.mxu0 %v681
    %976 = vmatprep.subr.mxu0 %v678
    %977 = vmatpush2.msra.mxu0 %v677
    %978 = vmatprep.subr.mxu0 %v674
    %979 = vmatpush2.msra.mxu0 %v673
    %980 = vmatprep.subr.mxu0 %v670
    %981 = vmatpush2.msra.mxu0 %v669
    %982 = vmatprep.subr.mxu0 %v666
    %983 = vmatpush2.msra.mxu0 %v665
    %984 = vmatprep.subr.mxu0 %v662
    %985 = vmatpush2.msra.mxu0 %v661
    %986 = vmatprep.subr.mxu0 %v658
    %987 = vmatpush2.msra.mxu0 %v657
    %988 = vmatprep.subr.mxu0 %v654
    %989 = vmatpush2.msra.mxu0 %v653
    %990 = vmatprep.subr.mxu0 %v650
    %991 = vmatpush2.msra.mxu0 %v649
    %992 = vmatprep.subr.mxu0 %v646
    %993 = vmatpush2.msra.mxu0 %v645
    %994 = vmatprep.subr.mxu0 %v642
    %995 = vmatpush2.msra.mxu0 %v641
    %996 = vmatprep.subr.mxu0 %v638
    %997 = vmatpush2.msra.mxu0 %v637
    %998 = vmatprep.mubr.f32.mxu0 %v442
    %999 = vmatmul.mubr.f32.gmra.mxu0 %v441
    %v1000 = vpop.f32.mrf.mxu0
    %v1001 = vadd.f32 %v930, %v1000
    %v1002 = vpop.f32.mrf.mxu0
    %v1003 = vadd.f32 %v932, %v1002
    %1004 = vdwg.mxu0
    %v1005 = vmul.f32 %v859, 0.01
    %v1006 = vmul.f32 %v861, 0.01
    %v1007 = vmul.f32 %v1001, 0.01
    %v1008 = vmul.f32 %v1003, 0.01
    %v1009 = vmax.f32 %v859, %v1005
    %v1010 = vmax.f32 %v861, %v1006
    %v1011 = vmax.f32 %v1001, %v1007
    %v1012 = vmax.f32 %v1003, %v1008
    %v1013 = vld [vmem:[#allocation8] sm:$0xff]
    %v1014 = vld [vmem:[#allocation8 + $0x8] sm:$0xff]
    %v1015 = vld [vmem:[#allocation8 + $0x10] sm:$0xff]
    %v1016 = vld [vmem:[#allocation8 + $0x18] sm:$0xff]
    %v1017 = vld [vmem:[#allocation8 + $0x20] sm:$0xff]
    %v1018 = vld [vmem:[#allocation8 + $0x28] sm:$0xff]
    %v1019 = vld [vmem:[#allocation8 + $0x30] sm:$0xff]
    %v1020 = vld [vmem:[#allocation8 + $0x38] sm:$0xff]
    %v1021 = vld [vmem:[#allocation8 + $0x40] sm:$0xff]
    %v1022 = vld [vmem:[#allocation8 + $0x48] sm:$0xff]
    %v1023 = vld [vmem:[#allocation8 + $0x50] sm:$0xff]
    %v1024 = vld [vmem:[#allocation8 + $0x58] sm:$0xff]
    %v1025 = vld [vmem:[#allocation8 + $0x60] sm:$0xff]
    %v1026 = vld [vmem:[#allocation8 + $0x68] sm:$0xff]
    %v1027 = vld [vmem:[#allocation8 + $0x70] sm:$0xff]
    %v1028 = vld [vmem:[#allocation8 + $0x78] sm:$0xff]
    %v1029 = vld [vmem:[#allocation8 + $0x80] sm:$0xff]
    %v1030 = vld [vmem:[#allocation8 + $0x88] sm:$0xff]
    %v1031 = vld [vmem:[#allocation8 + $0x90] sm:$0xff]
    %v1032 = vld [vmem:[#allocation8 + $0x98] sm:$0xff]
    %v1033 = vld [vmem:[#allocation8 + $0xa0] sm:$0xff]
    %v1034 = vld [vmem:[#allocation8 + $0xa8] sm:$0xff]
    %v1035 = vld [vmem:[#allocation8 + $0xb0] sm:$0xff]
    %v1036 = vld [vmem:[#allocation8 + $0xb8] sm:$0xff]
    %v1037 = vld [vmem:[#allocation8 + $0xc0] sm:$0xff]
    %v1038 = vld [vmem:[#allocation8 + $0xc8] sm:$0xff]
    %v1039 = vld [vmem:[#allocation8 + $0xd0] sm:$0xff]
    %v1040 = vld [vmem:[#allocation8 + $0xd8] sm:$0xff]
    %v1041 = vld [vmem:[#allocation8 + $0xe0] sm:$0xff]
    %v1042 = vld [vmem:[#allocation8 + $0xe8] sm:$0xff]
    %v1043 = vld [vmem:[#allocation8 + $0xf0] sm:$0xff]
    %v1044 = vld [vmem:[#allocation8 + $0xf8] sm:$0xff]
    %v1045 = vld [vmem:[#allocation8 + $0x100] sm:$0xff]
    %v1046 = vld [vmem:[#allocation8 + $0x108] sm:$0xff]
    %v1047 = vld [vmem:[#allocation8 + $0x110] sm:$0xff]
    %v1048 = vld [vmem:[#allocation8 + $0x118] sm:$0xff]
    %v1049 = vld [vmem:[#allocation8 + $0x120] sm:$0xff]
    %v1050 = vld [vmem:[#allocation8 + $0x128] sm:$0xff]
    %v1051 = vld [vmem:[#allocation8 + $0x130] sm:$0xff]
    %v1052 = vld [vmem:[#allocation8 + $0x138] sm:$0xff]
    %v1053 = vld [vmem:[#allocation8 + $0x140] sm:$0xff]
    %v1054 = vld [vmem:[#allocation8 + $0x148] sm:$0xff]
    %v1055 = vld [vmem:[#allocation8 + $0x150] sm:$0xff]
    %v1056 = vld [vmem:[#allocation8 + $0x158] sm:$0xff]
    %v1057 = vld [vmem:[#allocation8 + $0x160] sm:$0xff]
    %v1058 = vld [vmem:[#allocation8 + $0x168] sm:$0xff]
    %v1059 = vld [vmem:[#allocation8 + $0x170] sm:$0xff]
    %v1060 = vld [vmem:[#allocation8 + $0x178] sm:$0xff]
    %v1061 = vld [vmem:[#allocation8 + $0x180] sm:$0xff]
    %v1062 = vld [vmem:[#allocation8 + $0x188] sm:$0xff]
    %v1063 = vld [vmem:[#allocation8 + $0x190] sm:$0xff]
    %v1064 = vld [vmem:[#allocation8 + $0x198] sm:$0xff]
    %v1065 = vld [vmem:[#allocation8 + $0x1a0] sm:$0xff]
    %v1066 = vld [vmem:[#allocation8 + $0x1a8] sm:$0xff]
    %v1067 = vld [vmem:[#allocation8 + $0x1b0] sm:$0xff]
    %v1068 = vld [vmem:[#allocation8 + $0x1b8] sm:$0xff]
    %v1069 = vld [vmem:[#allocation8 + $0x1c0] sm:$0xff]
    %v1070 = vld [vmem:[#allocation8 + $0x1c8] sm:$0xff]
    %v1071 = vld [vmem:[#allocation8 + $0x1d0] sm:$0xff]
    %v1072 = vld [vmem:[#allocation8 + $0x1d8] sm:$0xff]
    %v1073 = vld [vmem:[#allocation8 + $0x1e0] sm:$0xff]
    %v1074 = vld [vmem:[#allocation8 + $0x1e8] sm:$0xff]
    %v1075 = vld [vmem:[#allocation8 + $0x1f0] sm:$0xff]
    %v1076 = vld [vmem:[#allocation8 + $0x1f8] sm:$0xff]
    %v1077 = vld [vmem:[#allocation8 + $0x200] sm:$0xff]
    %v1078 = vld [vmem:[#allocation8 + $0x208] sm:$0xff]
    %v1079 = vld [vmem:[#allocation8 + $0x210] sm:$0xff]
    %v1080 = vld [vmem:[#allocation8 + $0x218] sm:$0xff]
    %v1081 = vld [vmem:[#allocation8 + $0x220] sm:$0xff]
    %v1082 = vld [vmem:[#allocation8 + $0x228] sm:$0xff]
    %v1083 = vld [vmem:[#allocation8 + $0x230] sm:$0xff]
    %v1084 = vld [vmem:[#allocation8 + $0x238] sm:$0xff]
    %v1085 = vld [vmem:[#allocation8 + $0x240] sm:$0xff]
    %v1086 = vld [vmem:[#allocation8 + $0x248] sm:$0xff]
    %v1087 = vld [vmem:[#allocation8 + $0x250] sm:$0xff]
    %v1088 = vld [vmem:[#allocation8 + $0x258] sm:$0xff]
    %v1089 = vld [vmem:[#allocation8 + $0x260] sm:$0xff]
    %v1090 = vld [vmem:[#allocation8 + $0x268] sm:$0xff]
    %v1091 = vld [vmem:[#allocation8 + $0x270] sm:$0xff]
    %v1092 = vld [vmem:[#allocation8 + $0x278] sm:$0xff]
    %v1093 = vld [vmem:[#allocation8 + $0x280] sm:$0xff]
    %v1094 = vld [vmem:[#allocation8 + $0x288] sm:$0xff]
    %v1095 = vld [vmem:[#allocation8 + $0x290] sm:$0xff]
    %v1096 = vld [vmem:[#allocation8 + $0x298] sm:$0xff]
    %v1097 = vld [vmem:[#allocation8 + $0x2a0] sm:$0xff]
    %v1098 = vld [vmem:[#allocation8 + $0x2a8] sm:$0xff]
    %v1099 = vld [vmem:[#allocation8 + $0x2b0] sm:$0xff]
    %v1100 = vld [vmem:[#allocation8 + $0x2b8] sm:$0xff]
    %v1101 = vld [vmem:[#allocation8 + $0x2c0] sm:$0xff]
    %v1102 = vld [vmem:[#allocation8 + $0x2c8] sm:$0xff]
    %v1103 = vld [vmem:[#allocation8 + $0x2d0] sm:$0xff]
    %v1104 = vld [vmem:[#allocation8 + $0x2d8] sm:$0xff]
    %v1105 = vld [vmem:[#allocation8 + $0x2e0] sm:$0xff]
    %v1106 = vld [vmem:[#allocation8 + $0x2e8] sm:$0xff]
    %v1107 = vld [vmem:[#allocation8 + $0x2f0] sm:$0xff]
    %v1108 = vld [vmem:[#allocation8 + $0x2f8] sm:$0xff]
    %v1109 = vld [vmem:[#allocation8 + $0x300] sm:$0xff]
    %v1110 = vld [vmem:[#allocation8 + $0x308] sm:$0xff]
    %v1111 = vld [vmem:[#allocation8 + $0x310] sm:$0xff]
    %v1112 = vld [vmem:[#allocation8 + $0x318] sm:$0xff]
    %v1113 = vld [vmem:[#allocation8 + $0x320] sm:$0xff]
    %v1114 = vld [vmem:[#allocation8 + $0x328] sm:$0xff]
    %v1115 = vld [vmem:[#allocation8 + $0x330] sm:$0xff]
    %v1116 = vld [vmem:[#allocation8 + $0x338] sm:$0xff]
    %v1117 = vld [vmem:[#allocation8 + $0x340] sm:$0xff]
    %v1118 = vld [vmem:[#allocation8 + $0x348] sm:$0xff]
    %v1119 = vld [vmem:[#allocation8 + $0x350] sm:$0xff]
    %v1120 = vld [vmem:[#allocation8 + $0x358] sm:$0xff]
    %v1121 = vld [vmem:[#allocation8 + $0x360] sm:$0xff]
    %v1122 = vld [vmem:[#allocation8 + $0x368] sm:$0xff]
    %v1123 = vld [vmem:[#allocation8 + $0x370] sm:$0xff]
    %v1124 = vld [vmem:[#allocation8 + $0x378] sm:$0xff]
    %v1125 = vld [vmem:[#allocation8 + $0x380] sm:$0xff]
    %v1126 = vld [vmem:[#allocation8 + $0x388] sm:$0xff]
    %v1127 = vld [vmem:[#allocation8 + $0x390] sm:$0xff]
    %v1128 = vld [vmem:[#allocation8 + $0x398] sm:$0xff]
    %v1129 = vld [vmem:[#allocation8 + $0x3a0] sm:$0xff]
    %v1130 = vld [vmem:[#allocation8 + $0x3a8] sm:$0xff]
    %v1131 = vld [vmem:[#allocation8 + $0x3b0] sm:$0xff]
    %v1132 = vld [vmem:[#allocation8 + $0x3b8] sm:$0xff]
    %v1133 = vld [vmem:[#allocation8 + $0x3c0] sm:$0xff]
    %v1134 = vld [vmem:[#allocation8 + $0x3c8] sm:$0xff]
    %v1135 = vld [vmem:[#allocation8 + $0x3d0] sm:$0xff]
    %v1136 = vld [vmem:[#allocation8 + $0x3d8] sm:$0xff]
    %v1137 = vld [vmem:[#allocation8 + $0x3e0] sm:$0xff]
    %v1138 = vld [vmem:[#allocation8 + $0x3e8] sm:$0xff]
    %v1139 = vld [vmem:[#allocation8 + $0x3f0] sm:$0xff]
    %v1140 = vld [vmem:[#allocation8 + $0x3f8] sm:$0xff]
    %v1141 = vld [vmem:[%s8] sm:$0x3]
    %v1143 = vlaneseq
    %v1144 = vshrl.u32 %v1143, 7
    %v1145 = vsub.s32 0, %v1144
    %v1146 = vrot.slane %v1141, %v1145
    %v1147 = vlaneseq
    %v1148 = vshrl.u32 %v1147, 7
    %v1149 = vsub.s32 1, %v1148
    %v1150 = vrot.slane %v1141, %v1149
    %1153 = vmatprep.subr.mxu0 %v1044
    %1154 = vmatpush1.msra.mxu0 %v1043
    %1155 = vmatprep.subr.mxu0 %v1042
    %1156 = vmatpush1.msra.mxu0 %v1041
    %1157 = vmatprep.subr.mxu0 %v1040
    %1158 = vmatpush1.msra.mxu0 %v1039
    %1159 = vmatprep.subr.mxu0 %v1038
    %1160 = vmatpush1.msra.mxu0 %v1037
    %1161 = vmatprep.subr.mxu0 %v1036
    %1162 = vmatpush1.msra.mxu0 %v1035
    %1163 = vmatprep.subr.mxu0 %v1034
    %1164 = vmatpush1.msra.mxu0 %v1033
    %1165 = vmatprep.subr.mxu0 %v1032
    %1166 = vmatpush1.msra.mxu0 %v1031
    %1167 = vmatprep.subr.mxu0 %v1030
    %1168 = vmatpush1.msra.mxu0 %v1029
    %1169 = vmatprep.subr.mxu0 %v1028
    %1170 = vmatpush1.msra.mxu0 %v1027
    %1171 = vmatprep.subr.mxu0 %v1026
    %1172 = vmatpush1.msra.mxu0 %v1025
    %1173 = vmatprep.subr.mxu0 %v1024
    %1174 = vmatpush1.msra.mxu0 %v1023
    %1175 = vmatprep.subr.mxu0 %v1022
    %1176 = vmatpush1.msra.mxu0 %v1021
    %1177 = vmatprep.subr.mxu0 %v1020
    %1178 = vmatpush1.msra.mxu0 %v1019
    %1179 = vmatprep.subr.mxu0 %v1018
    %1180 = vmatpush1.msra.mxu0 %v1017
    %1181 = vmatprep.subr.mxu0 %v1016
    %1182 = vmatpush1.msra.mxu0 %v1015
    %1183 = vmatprep.subr.mxu0 %v1014
    %1184 = vmatpush1.msra.mxu0 %v1013
    %1185 = vmatprep.subr.mxu0 %v1076
    %1186 = vmatpush2.msra.mxu0 %v1075
    %1187 = vmatprep.subr.mxu0 %v1074
    %1188 = vmatpush2.msra.mxu0 %v1073
    %1189 = vmatprep.subr.mxu0 %v1072
    %1190 = vmatpush2.msra.mxu0 %v1071
    %1191 = vmatprep.subr.mxu0 %v1070
    %1192 = vmatpush2.msra.mxu0 %v1069
    %1193 = vmatprep.subr.mxu0 %v1068
    %1194 = vmatpush2.msra.mxu0 %v1067
    %1195 = vmatprep.subr.mxu0 %v1066
    %1196 = vmatpush2.msra.mxu0 %v1065
    %1197 = vmatprep.subr.mxu0 %v1064
    %1198 = vmatpush2.msra.mxu0 %v1063
    %1199 = vmatprep.subr.mxu0 %v1062
    %1200 = vmatpush2.msra.mxu0 %v1061
    %1201 = vmatprep.subr.mxu0 %v1060
    %1202 = vmatpush2.msra.mxu0 %v1059
    %1203 = vmatprep.subr.mxu0 %v1058
    %1204 = vmatpush2.msra.mxu0 %v1057
    %1205 = vmatprep.subr.mxu0 %v1056
    %1206 = vmatpush2.msra.mxu0 %v1055
    %1207 = vmatprep.subr.mxu0 %v1054
    %1208 = vmatpush2.msra.mxu0 %v1053
    %1209 = vmatprep.subr.mxu0 %v1052
    %1210 = vmatpush2.msra.mxu0 %v1051
    %1211 = vmatprep.subr.mxu0 %v1050
    %1212 = vmatpush2.msra.mxu0 %v1049
    %1213 = vmatprep.subr.mxu0 %v1048
    %1214 = vmatpush2.msra.mxu0 %v1047
    %1215 = vmatprep.subr.mxu0 %v1046
    %1216 = vmatpush2.msra.mxu0 %v1045
    %1217 = vmatprep.mubr.f32.mxu0 %v1010
    %1218 = vmatmul.mubr.f32.gmra.mxu0 %v1009
    %v1219 = vpop.f32.mrf.mxu0
    %v1220 = vadd.f32 %v1146, %v1219
    %v1221 = vpop.f32.mrf.mxu0
    %v1222 = vadd.f32 %v1150, %v1221
    %1223 = vdwg.mxu0
    %1224 = vmatprep.subr.mxu0 %v1108
    %1225 = vmatpush1.msra.mxu0 %v1107
    %1226 = vmatprep.subr.mxu0 %v1106
    %1227 = vmatpush1.msra.mxu0 %v1105
    %1228 = vmatprep.subr.mxu0 %v1104
    %1229 = vmatpush1.msra.mxu0 %v1103
    %1230 = vmatprep.subr.mxu0 %v1102
    %1231 = vmatpush1.msra.mxu0 %v1101
    %1232 = vmatprep.subr.mxu0 %v1100
    %1233 = vmatpush1.msra.mxu0 %v1099
    %1234 = vmatprep.subr.mxu0 %v1098
    %1235 = vmatpush1.msra.mxu0 %v1097
    %1236 = vmatprep.subr.mxu0 %v1096
    %1237 = vmatpush1.msra.mxu0 %v1095
    %1238 = vmatprep.subr.mxu0 %v1094
    %1239 = vmatpush1.msra.mxu0 %v1093
    %1240 = vmatprep.subr.mxu0 %v1092
    %1241 = vmatpush1.msra.mxu0 %v1091
    %1242 = vmatprep.subr.mxu0 %v1090
    %1243 = vmatpush1.msra.mxu0 %v1089
    %1244 = vmatprep.subr.mxu0 %v1088
    %1245 = vmatpush1.msra.mxu0 %v1087
    %1246 = vmatprep.subr.mxu0 %v1086
    %1247 = vmatpush1.msra.mxu0 %v1085
    %1248 = vmatprep.subr.mxu0 %v1084
    %1249 = vmatpush1.msra.mxu0 %v1083
    %1250 = vmatprep.subr.mxu0 %v1082
    %1251 = vmatpush1.msra.mxu0 %v1081
    %1252 = vmatprep.subr.mxu0 %v1080
    %1253 = vmatpush1.msra.mxu0 %v1079
    %1254 = vmatprep.subr.mxu0 %v1078
    %1255 = vmatpush1.msra.mxu0 %v1077
    %1256 = vmatprep.subr.mxu0 %v1140
    %1257 = vmatpush2.msra.mxu0 %v1139
    %1258 = vmatprep.subr.mxu0 %v1138
    %1259 = vmatpush2.msra.mxu0 %v1137
    %1260 = vmatprep.subr.mxu0 %v1136
    %1261 = vmatpush2.msra.mxu0 %v1135
    %1262 = vmatprep.subr.mxu0 %v1134
    %1263 = vmatpush2.msra.mxu0 %v1133
    %1264 = vmatprep.subr.mxu0 %v1132
    %1265 = vmatpush2.msra.mxu0 %v1131
    %1266 = vmatprep.subr.mxu0 %v1130
    %1267 = vmatpush2.msra.mxu0 %v1129
    %1268 = vmatprep.subr.mxu0 %v1128
    %1269 = vmatpush2.msra.mxu0 %v1127
    %1270 = vmatprep.subr.mxu0 %v1126
    %1271 = vmatpush2.msra.mxu0 %v1125
    %1272 = vmatprep.subr.mxu0 %v1124
    %1273 = vmatpush2.msra.mxu0 %v1123
    %1274 = vmatprep.subr.mxu0 %v1122
    %1275 = vmatpush2.msra.mxu0 %v1121
    %1276 = vmatprep.subr.mxu0 %v1120
    %1277 = vmatpush2.msra.mxu0 %v1119
    %1278 = vmatprep.subr.mxu0 %v1118
    %1279 = vmatpush2.msra.mxu0 %v1117
    %1280 = vmatprep.subr.mxu0 %v1116
    %1281 = vmatpush2.msra.mxu0 %v1115
    %1282 = vmatprep.subr.mxu0 %v1114
    %1283 = vmatpush2.msra.mxu0 %v1113
    %1284 = vmatprep.subr.mxu0 %v1112
    %1285 = vmatpush2.msra.mxu0 %v1111
    %1286 = vmatprep.subr.mxu0 %v1110
    %1287 = vmatpush2.msra.mxu0 %v1109
    %1288 = vmatprep.mubr.f32.mxu0 %v1012
    %1289 = vmatmul.mubr.f32.gmra.mxu0 %v1011
    %v1290 = vpop.f32.mrf.mxu0
    %v1291 = vadd.f32 %v1220, %v1290
    %v1292 = vpop.f32.mrf.mxu0
    %v1293 = vadd.f32 %v1222, %v1292
    %1294 = vdwg.mxu0
    %v1295 = vmul.f32 %v1291, 0.01
    %v1296 = vmul.f32 %v1293, 0.01
    %v1297 = vmax.f32 %v1291, %v1295
    %v1298 = vmax.f32 %v1293, %v1296
    %v1299 = vld [vmem:[#allocation10] sm:$0xff]
    %v1300 = vld [vmem:[#allocation10 + $0x8] sm:$0xff]
    %v1301 = vld [vmem:[#allocation10 + $0x10] sm:$0xff]
    %v1302 = vld [vmem:[#allocation10 + $0x18] sm:$0xff]
    %v1303 = vld [vmem:[#allocation10 + $0x20] sm:$0xff]
    %v1304 = vld [vmem:[#allocation10 + $0x28] sm:$0xff]
    %v1305 = vld [vmem:[#allocation10 + $0x30] sm:$0xff]
    %v1306 = vld [vmem:[#allocation10 + $0x38] sm:$0xff]
    %v1307 = vld [vmem:[#allocation10 + $0x40] sm:$0xff]
    %v1308 = vld [vmem:[#allocation10 + $0x48] sm:$0xff]
    %v1309 = vld [vmem:[#allocation10 + $0x50] sm:$0xff]
    %v1310 = vld [vmem:[#allocation10 + $0x58] sm:$0xff]
    %v1311 = vld [vmem:[#allocation10 + $0x60] sm:$0xff]
    %v1312 = vld [vmem:[#allocation10 + $0x68] sm:$0xff]
    %v1313 = vld [vmem:[#allocation10 + $0x70] sm:$0xff]
    %v1314 = vld [vmem:[#allocation10 + $0x78] sm:$0xff]
    %v1315 = vld [vmem:[#allocation10 + $0x80] sm:$0xff]
    %v1316 = vld [vmem:[#allocation10 + $0x88] sm:$0xff]
    %v1317 = vld [vmem:[#allocation10 + $0x90] sm:$0xff]
    %v1318 = vld [vmem:[#allocation10 + $0x98] sm:$0xff]
    %v1319 = vld [vmem:[#allocation10 + $0xa0] sm:$0xff]
    %v1320 = vld [vmem:[#allocation10 + $0xa8] sm:$0xff]
    %v1321 = vld [vmem:[#allocation10 + $0xb0] sm:$0xff]
    %v1322 = vld [vmem:[#allocation10 + $0xb8] sm:$0xff]
    %v1323 = vld [vmem:[#allocation10 + $0xc0] sm:$0xff]
    %v1324 = vld [vmem:[#allocation10 + $0xc8] sm:$0xff]
    %v1325 = vld [vmem:[#allocation10 + $0xd0] sm:$0xff]
    %v1326 = vld [vmem:[#allocation10 + $0xd8] sm:$0xff]
    %v1327 = vld [vmem:[#allocation10 + $0xe0] sm:$0xff]
    %v1328 = vld [vmem:[#allocation10 + $0xe8] sm:$0xff]
    %v1329 = vld [vmem:[#allocation10 + $0xf0] sm:$0xff]
    %v1330 = vld [vmem:[#allocation10 + $0xf8] sm:$0xff]
    %v1331 = vld [vmem:[%s10] sm:$0x1]
    %v1333 = vlaneseq
    %v1334 = vshrl.u32 %v1333, 7
    %v1335 = vsub.s32 0, %v1334
    %v1336 = vrot.slane %v1331, %v1335
    %1338 = vmatprep.subr.mxu0 0.0
    %1339 = vmatpush1.msra.mxu0 %v1314
    %1340 = vmatprep.subr.mxu0 0.0
    %1341 = vmatpush1.msra.mxu0 %v1313
    %1342 = vmatprep.subr.mxu0 0.0
    %1343 = vmatpush1.msra.mxu0 %v1312
    %1344 = vmatprep.subr.mxu0 0.0
    %1345 = vmatpush1.msra.mxu0 %v1311
    %1346 = vmatprep.subr.mxu0 0.0
    %1347 = vmatpush1.msra.mxu0 %v1310
    %1348 = vmatprep.subr.mxu0 0.0
    %1349 = vmatpush1.msra.mxu0 %v1309
    %1350 = vmatprep.subr.mxu0 0.0
    %1351 = vmatpush1.msra.mxu0 %v1308
    %1352 = vmatprep.subr.mxu0 0.0
    %1353 = vmatpush1.msra.mxu0 %v1307
    %1354 = vmatprep.subr.mxu0 0.0
    %1355 = vmatpush1.msra.mxu0 %v1306
    %1356 = vmatprep.subr.mxu0 0.0
    %1357 = vmatpush1.msra.mxu0 %v1305
    %1358 = vmatprep.subr.mxu0 0.0
    %1359 = vmatpush1.msra.mxu0 %v1304
    %1360 = vmatprep.subr.mxu0 0.0
    %1361 = vmatpush1.msra.mxu0 %v1303
    %1362 = vmatprep.subr.mxu0 0.0
    %1363 = vmatpush1.msra.mxu0 %v1302
    %1364 = vmatprep.subr.mxu0 0.0
    %1365 = vmatpush1.msra.mxu0 %v1301
    %1366 = vmatprep.subr.mxu0 0.0
    %1367 = vmatpush1.msra.mxu0 %v1300
    %1368 = vmatprep.subr.mxu0 0.0
    %1369 = vmatpush1.msra.mxu0 %v1299
    %1370 = vmatprep.subr.mxu0 0.0
    %1371 = vmatpush2.msra.mxu0 %v1330
    %1372 = vmatprep.subr.mxu0 0.0
    %1373 = vmatpush2.msra.mxu0 %v1329
    %1374 = vmatprep.subr.mxu0 0.0
    %1375 = vmatpush2.msra.mxu0 %v1328
    %1376 = vmatprep.subr.mxu0 0.0
    %1377 = vmatpush2.msra.mxu0 %v1327
    %1378 = vmatprep.subr.mxu0 0.0
    %1379 = vmatpush2.msra.mxu0 %v1326
    %1380 = vmatprep.subr.mxu0 0.0
    %1381 = vmatpush2.msra.mxu0 %v1325
    %1382 = vmatprep.subr.mxu0 0.0
    %1383 = vmatpush2.msra.mxu0 %v1324
    %1384 = vmatprep.subr.mxu0 0.0
    %1385 = vmatpush2.msra.mxu0 %v1323
    %1386 = vmatprep.subr.mxu0 0.0
    %1387 = vmatpush2.msra.mxu0 %v1322
    %1388 = vmatprep.subr.mxu0 0.0
    %1389 = vmatpush2.msra.mxu0 %v1321
    %1390 = vmatprep.subr.mxu0 0.0
    %1391 = vmatpush2.msra.mxu0 %v1320
    %1392 = vmatprep.subr.mxu0 0.0
    %1393 = vmatpush2.msra.mxu0 %v1319
    %1394 = vmatprep.subr.mxu0 0.0
    %1395 = vmatpush2.msra.mxu0 %v1318
    %1396 = vmatprep.subr.mxu0 0.0
    %1397 = vmatpush2.msra.mxu0 %v1317
    %1398 = vmatprep.subr.mxu0 0.0
    %1399 = vmatpush2.msra.mxu0 %v1316
    %1400 = vmatprep.subr.mxu0 0.0
    %1401 = vmatpush2.msra.mxu0 %v1315
    %1402 = vmatprep.mubr.f32.mxu0 %v1298
    %1403 = vmatmul.mubr.f32.gmra.mxu0 %v1297
    %v1404 = vpop.f32.mrf.mxu0
    %v1405 = vadd.f32 %v1336, %v1404
    %v1406 = vpop.f32.mrf.mxu0
    %1407 = vdwg.mxu0
    %1408 = vst [vmem:[#allocation11] sm:$0xff] %v1405
    // Predicated region
    $region66: #{tpu_custom_call.1} parent=1 // pred_check
      _
    $region67: #{tpu_custom_call.1} parent=1 // pred_check_branch
      %1410 = sbr.rel (0) target = $region69
    $region68: #{tpu_custom_call.1} parent=1 // pred_region
      %s1412 = ssub.s32 128, 128
      %1413 = vsyncadd [#allocation4], %s1412
      %s1415 = sshll.u32 [#allocation11], 4
      %s1416 = int_to_ptr.vmem [resolvable:$true] %s1415
      %1418 = dma.vmem_to_hbm [thread:$0]  %s1416, 128, %s11, [#allocation4]
    $region69: #{tpu_custom_call.1} parent=1 // pred_fallthru
      _
    // Predicated region
    $region70: #{tpu_custom_call.1} parent=1 // pred_check
      _
    $region71: #{tpu_custom_call.1} parent=1 // pred_check_branch
      %1420 = sbr.rel (0) target = $region73
    $region72: #{tpu_custom_call.1} parent=1 // pred_region
      %1421 = dma.done [#allocation4], 128
    $region73: #{tpu_custom_call.1} parent=1 // pred_fallthru
      _
    %1422 = vsyncpa [#allocation3], 1
    %1423 = vsyncpa [#allocation6], 1
    %1424 = vsyncpa [#allocation9], 1
    %1425 = vsyncpa [#allocation4], 1

</llo_original>
